<compile_context>
chip_gen: v6e
topology: v6e:2x2x1
jax: 0.10.0
libtpu: 0.0.40
codegen_flags: <defaults>
</compile_context>

<pallas_src>
import math
from functools import partial

import jax
import jax.numpy as jnp
from jax.experimental import pallas as pl
from jax.experimental.pallas import tpu as pltpu


# --------------------------------- helpers --------------------------------- #

_MiB = 1 << 20


def _vmem_limit(block_bytes_estimate):
    """Scoped-VMEM limit for a pallas_call: 2x the estimated live block bytes,
    clamped to a range safe on v5e/v6e (128 MiB phys) and v7x (64 MiB phys).
    # TODO(synk): re-derive per generation (pltpu.get_tpu_info) for very large D.
    """
    return int(min(max(2 * block_bytes_estimate, 16 * _MiB), 96 * _MiB))


def _row_tiling(n, target=512):
    """Row tile (tm) and padded row count for a (n, D) row-streamed kernel.
    512-row tiles reach ~85% of the HBM roofline on v6e; n <= target -> 1 block."""
    if n <= target:
        return n, n                                  # full-dim block: always legal
    for t in range(target, 63, -8):                  # largest mult-of-8 divisor
        if n % t == 0:
            return t, n
    return target, -(-n // target) * target          # no divisor: pad (sliced after)


def _choose_q_tile(tq_total, n_heads, dh, tk, cov_bytes, cmp_bytes,
                   budget_bytes=24 * _MiB):
    """Pick the Tq tile so the per-grid-step VMEM footprint (double-buffered
    q / coverage / out blocks + resident kv + f32 scratch) stays under budget."""
    d = n_heads * dh

    def step_bytes(tq):
        return (2 * n_heads * tk * dh * cmp_bytes      # kv block (double-buffered)
                + 2 * n_heads * tq * dh * cmp_bytes    # q block
                + 2 * n_heads * tq * tk * cov_bytes    # coverage block
                + 2 * tq * d * 4                       # out block (<= f32)
                + tq * tk * 4 + tq * d * 4)            # per-head softmax + accumulator

    if tq_total <= 8 or tq_total % 8 != 0:
        return tq_total, tq_total                      # full-dim block: always legal
    for t in (512, 256, 128, 64, 32, 16, 8):
        if t <= tq_total and tq_total % t == 0 and step_bytes(t) <= budget_bytes:
            return t, tq_total
    # TODO(synk): if even tq=8 overflows the budget (huge H*Tk), Tk needs tiling too.
    return 8, -(-tq_total // 8) * 8


# ----------------------------- Pallas kernels ------------------------------ #

def _ln_qproj_kernel(x_ref, g_ref, b_ref, wq_ref, bq_ref, o_ref, *, scale):
    """Fused LayerNorm + query projection + 1/sqrt(dh) scaling on a row tile.

    Single-pass moments (E[x^2] - E[x]^2) so the two XLU reductions are
    independent; MXU operands cast to the weight dtype (bf16), f32 accumulate.
    """
    x = x_ref[...].astype(jnp.float32)
    mean = jnp.mean(x, axis=-1, keepdims=True)
    msq = jnp.mean(x * x, axis=-1, keepdims=True)
    var = jnp.maximum(msq - mean * mean, 0.0)
    xn = (x - mean) * jax.lax.rsqrt(var + 1e-5)
    xn = xn * g_ref[...].astype(jnp.float32) + b_ref[...].astype(jnp.float32)
    acc = jnp.dot(xn.astype(wq_ref.dtype), wq_ref[...],
                  preferred_element_type=jnp.float32)
    acc = (acc + bq_ref[...].astype(jnp.float32)) * scale
    o_ref[...] = acc.astype(o_ref.dtype)


def _linear_kernel(x_ref, w_ref, b_ref, o_ref):
    """Row-tiled dense layer (the single shared K/V projection, share=2)."""
    acc = jnp.dot(x_ref[...].astype(w_ref.dtype), w_ref[...],
                  preferred_element_type=jnp.float32)
    o_ref[...] = (acc + b_ref[...].astype(jnp.float32)).astype(o_ref.dtype)


def _attn_kernel(q_ref, kv_ref, *rest, n_heads, masked):
    """One (batch, q-tile) grid step, all heads.

    q_ref  : (1, H, tq, dh)   already scaled by 1/sqrt(dh), compute dtype (bf16)
    kv_ref : (1, H, Tk, dh)   shared key/value projection (share=2 -> k == v)
    [mask_ref: (1, tq, Tk) int8, 1 = masked out]        (masked variant only)
    wo_ref : (H, dh, D)       output projection, resident across grid steps
    bo_ref : (1, D)
    out_ref: (1, tq, D)       lane-dense (last dim = D)
    cov_ref: (1, H, tq, Tk)   attention weights (coverage), bf16 by default

    Per head: QK^T -> softmax (exact normalization for the stored coverage)
    -> PV -> accumulate ctx_h @ W_o[h] into ONE (tq, D) f32 accumulator
    (no (H, tq, D) intermediate; head merge rides on the MXU accumulation).
    """
    if masked:
        mask_ref, wo_ref, bo_ref, out_ref, cov_ref = rest
    else:
        wo_ref, bo_ref, out_ref, cov_ref = rest

    tq = q_ref.shape[2]
    d_model = out_ref.shape[2]

    if masked:
        # int8 mask -> -1e9 additive bias, built once per grid step, reused per head
        neg_bias = mask_ref[0].astype(jnp.float32) * jnp.float32(-1e9)   # (tq, Tk)

    acc = jnp.zeros((tq, d_model), jnp.float32)
    for h in range(n_heads):                            # H is static; unrolled
        qh = q_ref[0, h]                                # (tq, dh)
        kh = kv_ref[0, h]                               # (Tk, dh) -- both K and V
        s = jax.lax.dot_general(qh, kh, (((1,), (1,)), ((), ())),
                                preferred_element_type=jnp.float32)      # (tq, Tk)
        if masked:
            s = s + neg_bias
        m = jnp.max(s, axis=-1, keepdims=True)
        p = jnp.exp(s - m)
        p = p * (1.0 / jnp.sum(p, axis=-1, keepdims=True))   # exact normalization
        cov_ref[0, h] = p.astype(cov_ref.dtype)
        ctx = jnp.dot(p.astype(kh.dtype), kh,
                      preferred_element_type=jnp.float32)                # (tq, dh)
        acc = acc + jnp.dot(ctx.astype(wo_ref.dtype), wo_ref[h],
                            preferred_element_type=jnp.float32)          # (tq, D)

    out_ref[0] = (acc + bo_ref[...].astype(jnp.float32)).astype(out_ref.dtype)


# ------------------------------ kernel wrappers ----------------------------- #

def ln_q_proj(x2d, gamma, beta, w_q, b_q, scale, out_dtype):
    n, d = x2d.shape
    tm, n_pad = _row_tiling(n)
    if n_pad != n:
        x2d = jnp.pad(x2d, ((0, n_pad - n), (0, 0)))
    wb = jnp.dtype(w_q.dtype).itemsize
    ob = jnp.dtype(out_dtype).itemsize
    est = d * d * wb + 2 * tm * d * (4 + ob) + 4 * tm * d * 4 + 4 * d * 4
    out = pl.pallas_call(
        partial(_ln_qproj_kernel, scale=scale),
        out_shape=jax.ShapeDtypeStruct((n_pad, d), out_dtype),
        grid=(n_pad // tm,),
        in_specs=[pl.BlockSpec((tm, d), lambda i: (i, 0)),
                  pl.BlockSpec((1, d), lambda i: (0, 0)),
                  pl.BlockSpec((1, d), lambda i: (0, 0)),
                  pl.BlockSpec((d, d), lambda i: (0, 0)),     # resident weight
                  pl.BlockSpec((1, d), lambda i: (0, 0))],
        out_specs=pl.BlockSpec((tm, d), lambda i: (i, 0)),
        compiler_params=pltpu.CompilerParams(
            dimension_semantics=("parallel",),
            vmem_limit_bytes=_vmem_limit(est)),
    )(x2d, gamma, beta, w_q, b_q)
    return out[:n] if n_pad != n else out


def linear(x2d, w, b, out_dtype):
    n, din = x2d.shape
    dout = w.shape[1]
    tm, n_pad = _row_tiling(n)
    if n_pad != n:
        x2d = jnp.pad(x2d, ((0, n_pad - n), (0, 0)))
    wb = jnp.dtype(w.dtype).itemsize
    ob = jnp.dtype(out_dtype).itemsize
    est = din * dout * wb + 2 * tm * din * 4 + 2 * tm * dout * (4 + ob) + 4 * dout * 4
    out = pl.pallas_call(
        _linear_kernel,
        out_shape=jax.ShapeDtypeStruct((n_pad, dout), out_dtype),
        grid=(n_pad // tm,),
        in_specs=[pl.BlockSpec((tm, din), lambda i: (i, 0)),
                  pl.BlockSpec((din, dout), lambda i: (0, 0)),   # resident weight
                  pl.BlockSpec((1, dout), lambda i: (0, 0))],
        out_specs=pl.BlockSpec((tm, dout), lambda i: (i, 0)),
        compiler_params=pltpu.CompilerParams(
            dimension_semantics=("parallel",),
            vmem_limit_bytes=_vmem_limit(est)),
    )(x2d, w, b)
    return out[:n] if n_pad != n else out


def attention(q4, kv4, wo3, b_o, mask_i8=None, *, out_dtype=jnp.float32,
              coverage_dtype=jnp.bfloat16):
    """q4: (B,H,Tq,dh) pre-scaled, kv4: (B,H,Tk,dh) shared K/V, wo3: (H,dh,D),
    b_o: (1,D), mask_i8: optional (B,Tq,Tk) int8 (1 = masked out).
    Returns out: (B,Tq,D), coverage: (B,H,Tq,Tk)."""
    bsz, n_heads, tq_total, dh = q4.shape
    tk = kv4.shape[2]
    d = n_heads * dh
    cov_b = jnp.dtype(coverage_dtype).itemsize
    cmp_b = jnp.dtype(q4.dtype).itemsize
    tq, tq_pad = _choose_q_tile(tq_total, n_heads, dh, tk, cov_b, cmp_b)
    if tq_pad != tq_total:
        q4 = jnp.pad(q4, ((0, 0), (0, 0), (0, tq_pad - tq_total), (0, 0)))
        if mask_i8 is not None:
            mask_i8 = jnp.pad(mask_i8, ((0, 0), (0, tq_pad - tq_total), (0, 0)))
    masked = mask_i8 is not None

    in_specs = [pl.BlockSpec((1, n_heads, tq, dh), lambda bi, qi: (bi, 0, qi, 0)),
                pl.BlockSpec((1, n_heads, tk, dh), lambda bi, qi: (bi, 0, 0, 0))]
    args = [q4, kv4]
    if masked:
        in_specs.append(pl.BlockSpec((1, tq, tk), lambda bi, qi: (bi, qi, 0)))
        args.append(mask_i8)
    in_specs += [pl.BlockSpec((n_heads, dh, d), lambda bi, qi: (0, 0, 0)),  # resident W_o
                 pl.BlockSpec((1, d), lambda bi, qi: (0, 0))]
    args += [wo3, b_o]

    est = (2 * n_heads * tk * dh * cmp_b + 2 * n_heads * tq * dh * cmp_b
           + 2 * n_heads * tq * tk * cov_b
           + 2 * tq * d * jnp.dtype(out_dtype).itemsize
           + n_heads * dh * d * cmp_b + 2 * tq * tk * 4 + 2 * tq * d * 4)

    out, cov = pl.pallas_call(
        partial(_attn_kernel, n_heads=n_heads, masked=masked),
        out_shape=(jax.ShapeDtypeStruct((bsz, tq_pad, d), out_dtype),
                   jax.ShapeDtypeStruct((bsz, n_heads, tq_pad, tk), coverage_dtype)),
        grid=(bsz, tq_pad // tq),
        in_specs=in_specs,
        out_specs=[pl.BlockSpec((1, tq, d), lambda bi, qi: (bi, qi, 0)),
                   pl.BlockSpec((1, n_heads, tq, tk), lambda bi, qi: (bi, 0, qi, 0))],
        compiler_params=pltpu.CompilerParams(
            dimension_semantics=("parallel", "parallel"),
            vmem_limit_bytes=_vmem_limit(est)),
    )(*args)

    if tq_pad != tq_total:
        out = out[:, :tq_total]
        cov = cov[:, :, :tq_total]
    return out, cov


# ------------------------------ SourceAttention ----------------------------- #

def init_params(key, model_size, n_heads, dtype=jnp.bfloat16):
    """bf16 params by default: bf16 MXU throughput is ~3-4x f32 on v5e/v6e/v7x and
    halves the resident-weight VMEM; all matmuls still accumulate in f32."""
    assert model_size % n_heads == 0
    ks = jax.random.split(key, 3)
    s = 0.02
    return {
        "ln_gamma": jnp.ones((1, model_size), dtype),
        "ln_beta": jnp.zeros((1, model_size), dtype),
        "w_q": (s * jax.random.normal(ks[0], (model_size, model_size))).astype(dtype),
        "b_q": jnp.zeros((1, model_size), dtype),
        # share=2: one projection used for BOTH keys and values
        "w_kv": (s * jax.random.normal(ks[1], (model_size, model_size))).astype(dtype),
        "b_kv": jnp.zeros((1, model_size), dtype),
        "w_o": (s * jax.random.normal(ks[2], (model_size, model_size))).astype(dtype),
        "b_o": jnp.zeros((1, model_size), dtype),
        "n_heads": n_heads,
        "model_size": model_size,
    }


def source_attention_forward(params, x, context, attn_mask=None,
                             coverage_dtype=jnp.bfloat16):
    """x: [Tq, B, D], context: [Tk, B, D] (onmt time-first layout).
    Returns (o, coverage, incremental_cache=None) like SourceAttention.forward
    in eval mode (dropout = identity)."""
    tq_len, bsz, d = x.shape
    tk_len = context.shape[0]
    n_heads = params["n_heads"]
    dh = d // n_heads
    scale = 1.0 / math.sqrt(dh)
    cdt = params["w_q"].dtype            # compute dtype for all MXU operands

    # Fused LayerNorm + Q projection (+ 1/sqrt(dh)); single shared K/V projection.
    # Projections EMIT the compute dtype (bf16), so all downstream HBM traffic
    # (head-split transpose + attention streaming) is half-width.
    q_proj = ln_q_proj(x.reshape(tq_len * bsz, d), params["ln_gamma"],
                       params["ln_beta"], params["w_q"], params["b_q"],
                       scale, out_dtype=cdt)                       # (Tq*B, D)
    kv_proj = linear(context.reshape(tk_len * bsz, d), params["w_kv"],
                     params["b_kv"], out_dtype=cdt)                # (Tk*B, D)

    # Split heads: [T, B, H, dh] -> [B, H, T, dh].
    # TODO(synk): fold this (now bf16) transpose into the kernels; a batch-strided
    #   (tq, 1, D) attention block would violate the (8,128) second-minor rule.
    q4 = q_proj.reshape(tq_len, bsz, n_heads, dh).transpose(1, 2, 0, 3)
    kv4 = kv_proj.reshape(tk_len, bsz, n_heads, dh).transpose(1, 2, 0, 3)

    wo3 = params["w_o"].reshape(n_heads, dh, d)   # free leading-dim split

    # Boolean mask (True = masked out) travels as int8; the -1e9 bias is built
    # in-kernel (4x less mask DMA than a precomputed f32 bias).
    mask_i8 = None if attn_mask is None else attn_mask.astype(jnp.int8)

    out_btd, cov = attention(q4, kv4, wo3, params["b_o"], mask_i8,
                             out_dtype=x.dtype, coverage_dtype=coverage_dtype)

    o = out_btd.transpose(1, 0, 2)       # back to time-first (Tq, B, D)

    # F.dropout / variational_dropout with training=False -> identity.
    # TODO(synk): training-mode (variational) dropout would need pltpu.prng_* masking.
    incremental_cache = None             # TODO(synk): incremental decoding cache
    return o, cov, incremental_cache


# ----------------------------- pure-JAX reference ---------------------------- #

def reference_forward(params, x, context, attn_mask=None):
    tq_len, bsz, d = x.shape
    tk_len = context.shape[0]
    n_heads = params["n_heads"]
    dh = d // n_heads
    mean = jnp.mean(x, -1, keepdims=True)
    var = jnp.mean((x - mean) ** 2, -1, keepdims=True)
    q = (x - mean) / jnp.sqrt(var + 1e-5) * params["ln_gamma"][0].astype(jnp.float32) \
        + params["ln_beta"][0].astype(jnp.float32)
    qp = q @ params["w_q"].astype(jnp.float32) + params["b_q"][0].astype(jnp.float32)
    kvp = context @ params["w_kv"].astype(jnp.float32) + params["b_kv"][0].astype(jnp.float32)
    qh = qp.reshape(tq_len, bsz, n_heads, dh).transpose(1, 2, 0, 3) / math.sqrt(dh)
    kvh = kvp.reshape(tk_len, bsz, n_heads, dh).transpose(1, 2, 0, 3)
    s = jnp.einsum('bhqd,bhkd->bhqk', qh, kvh)
    if attn_mask is not None:
        s = s + jnp.where(attn_mask, -1e9, 0.0)[:, None]
    p = jax.nn.softmax(s, -1)
    ctx = jnp.einsum('bhqk,bhkd->bhqd', p, kvh)
    ctx = ctx.transpose(2, 0, 1, 3).reshape(tq_len, bsz, d)
    o = ctx @ params["w_o"].astype(jnp.float32) + params["b_o"][0].astype(jnp.float32)
    return o, p


# ----------------------------------- main ----------------------------------- #

if __name__ == "__main__":
    model_size = 32
    n_heads = 4
    Tq, Tk, B = 8, 8, 2

    key = jax.random.PRNGKey(0)
    k_p, k_x, k_c = jax.random.split(key, 3)

    params = init_params(k_p, model_size, n_heads)            # bf16 weights
    x = jax.random.normal(k_x, (Tq, B, model_size), jnp.float32)
    context = jax.random.normal(k_c, (Tk, B, model_size), jnp.float32)

    fwd = jax.jit(partial(source_attention_forward, params))

    # ---- no-mask path ----
    o, coverage, cache = fwd(x, context)
    jax.block_until_ready((o, coverage))
    o_ref, cov_ref = reference_forward(params, x, context)

    assert o.shape == (Tq, B, model_size) and o.dtype == x.dtype
    assert coverage.shape == (B, n_heads, Tq, Tk)
    assert cache is None
    cov_f32 = coverage.astype(jnp.float32)
    # softmax rows sum to ~1 (bf16 coverage storage -> loose tolerance)
    assert bool(jnp.allclose(jnp.sum(cov_f32, axis=-1), 1.0, atol=2e-2))
    assert bool(jnp.allclose(o, o_ref, atol=5e-3, rtol=5e-2))
    assert bool(jnp.allclose(cov_f32, cov_ref, atol=1e-2))

    # ---- masked path (mask out the last two key positions) ----
    mask = jnp.zeros((B, Tq, Tk), bool).at[:, :, -2:].set(True)
    o_m, cov_m, _ = jax.jit(partial(source_attention_forward, params))(x, context, mask)
    jax.block_until_ready((o_m, cov_m))
    o_mref, cov_mref = reference_forward(params, x, context, mask)
    cov_m_f32 = cov_m.astype(jnp.float32)
    assert o_m.shape == (Tq, B, model_size)
    assert bool(jnp.max(cov_m_f32[..., -2:]) < 1e-6)
    assert bool(jnp.allclose(jnp.sum(cov_m_f32, axis=-1), 1.0, atol=2e-2))
    assert bool(jnp.allclose(o_m, o_mref, atol=5e-3, rtol=5e-2))
    assert bool(jnp.allclose(cov_m_f32, cov_mref, atol=1e-2))

    print("KERNEL_OK")
</pallas_src>

<mosaic_0001>
module attributes {stable_mosaic.version = 11 : i64} {
  func.func @_linear_kernel(%arg0: i32, %arg1: memref<16x32xf32, #tpu.memory_space<vmem>>, %arg2: memref<32x32xbf16, #tpu.memory_space<vmem>>, %arg3: memref<1x32xbf16, #tpu.memory_space<vmem>>, %arg4: memref<16x32xbf16, #tpu.memory_space<vmem>>) attributes {dimension_semantics = [#tpu.dimension_semantics<parallel>], iteration_bounds = array<i64: 1>, scalar_prefetch = 0 : i64, scratch_operands = 0 : i64, tpu.core_type = #tpu.core_type<tc>, window_params = [{transform_indices = @transform_0, window_bounds = array<i64: 16, 32>}, {pipeline_mode = #tpu.pipeline_mode<synchronous>, transform_indices = @transform_1, window_bounds = array<i64: 32, 32>}, {pipeline_mode = #tpu.pipeline_mode<synchronous>, transform_indices = @transform_2, window_bounds = array<i64: 1, 32>}, {transform_indices = @transform_3, window_bounds = array<i64: 16, 32>}]} {
    %c0 = arith.constant 0 : index
    %c0_0 = arith.constant 0 : index
    %0 = vector.load %arg1[%c0, %c0_0] : memref<16x32xf32, #tpu.memory_space<vmem>>, vector<16x32xf32>
    %1 = arith.truncf %0 : vector<16x32xf32> to vector<16x32xbf16>
    %c0_1 = arith.constant 0 : index
    %c0_2 = arith.constant 0 : index
    %2 = vector.load %arg2[%c0_1, %c0_2] : memref<32x32xbf16, #tpu.memory_space<vmem>>, vector<32x32xbf16>
    %cst = arith.constant dense<0.000000e+00> : vector<16x32xf32>
    %3 = tpu.matmul %1, %2, %cst {dimension_numbers = #tpu.dot_dimension_numbers<[1], [0], [0], [1], [0, 0, 1, 1], [], []>} : vector<16x32xbf16>, vector<32x32xbf16>, vector<16x32xf32> -> vector<16x32xf32>
    %c0_3 = arith.constant 0 : index
    %c0_4 = arith.constant 0 : index
    %4 = vector.load %arg3[%c0_3, %c0_4] : memref<1x32xbf16, #tpu.memory_space<vmem>>, vector<1x32xbf16>
    %5 = arith.extf %4 : vector<1x32xbf16> to vector<1x32xf32>
    %6 = vector.broadcast %5 : vector<1x32xf32> to vector<16x32xf32>
    %7 = arith.addf %3, %6 : vector<16x32xf32>
    %8 = arith.truncf %7 : vector<16x32xf32> to vector<16x32xbf16>
    %c0_5 = arith.constant 0 : index
    %c0_6 = arith.constant 0 : index
    %9 = vector.load %arg4[%c0_5, %c0_6] : memref<16x32xbf16, #tpu.memory_space<vmem>>, vector<16x32xbf16>
    tpu.vector_store %arg4[%c0_5, %c0_6], %8 {strides = array<i32>} : memref<16x32xbf16, #tpu.memory_space<vmem>>, vector<16x32xbf16>,
    return
  }
  func.func @transform_0(%arg0: i32) -> (i32, i32) {
    %c0_i32 = arith.constant 0 : i32
    %c0_i32_0 = arith.constant 0 : i32
    return %arg0, %c0_i32 : i32, i32
  }
  func.func @transform_1(%arg0: i32) -> (i32, i32) {
    %c0_i32 = arith.constant 0 : i32
    %c0_i32_0 = arith.constant 0 : i32
    %c0_i32_1 = arith.constant 0 : i32
    return %c0_i32, %c0_i32_0 : i32, i32
  }
  func.func @transform_2(%arg0: i32) -> (i32, i32) {
    %c0_i32 = arith.constant 0 : i32
    %c0_i32_0 = arith.constant 0 : i32
    %c0_i32_1 = arith.constant 0 : i32
    return %c0_i32, %c0_i32_0 : i32, i32
  }
  func.func @transform_3(%arg0: i32) -> (i32, i32) {
    %c0_i32 = arith.constant 0 : i32
    %c0_i32_0 = arith.constant 0 : i32
    return %arg0, %c0_i32 : i32, i32
  }
}

module attributes {stable_mosaic.version = 11 : i64} {
  func.func @_ln_qproj_kernel(%arg0: i32, %arg1: memref<16x32xf32, #tpu.memory_space<vmem>>, %arg2: memref<1x32xbf16, #tpu.memory_space<vmem>>, %arg3: memref<1x32xbf16, #tpu.memory_space<vmem>>, %arg4: memref<32x32xbf16, #tpu.memory_space<vmem>>, %arg5: memref<1x32xbf16, #tpu.memory_space<vmem>>, %arg6: memref<16x32xbf16, #tpu.memory_space<vmem>>) attributes {dimension_semantics = [#tpu.dimension_semantics<parallel>], iteration_bounds = array<i64: 1>, scalar_prefetch = 0 : i64, scratch_operands = 0 : i64, tpu.core_type = #tpu.core_type<tc>, window_params = [{transform_indices = @transform_0, window_bounds = array<i64: 16, 32>}, {pipeline_mode = #tpu.pipeline_mode<synchronous>, transform_indices = @transform_1, window_bounds = array<i64: 1, 32>}, {pipeline_mode = #tpu.pipeline_mode<synchronous>, transform_indices = @transform_2, window_bounds = array<i64: 1, 32>}, {pipeline_mode = #tpu.pipeline_mode<synchronous>, transform_indices = @transform_3, window_bounds = array<i64: 32, 32>}, {pipeline_mode = #tpu.pipeline_mode<synchronous>, transform_indices = @transform_4, window_bounds = array<i64: 1, 32>}, {transform_indices = @transform_5, window_bounds = array<i64: 16, 32>}]} {
    %c0 = arith.constant 0 : index
    %c0_0 = arith.constant 0 : index
    %0 = vector.load %arg1[%c0, %c0_0] : memref<16x32xf32, #tpu.memory_space<vmem>>, vector<16x32xf32>
    %cst = arith.constant dense<0.000000e+00> : vector<16xf32>
    %1 = vector.multi_reduction <add>, %0, %cst [1] : vector<16x32xf32> to vector<16xf32>
    %2 = vector.shape_cast %1 : vector<16xf32> to vector<16x1xf32>
    %cst_1 = arith.constant 3.200000e+01 : f32
    %3 = vector.broadcast %cst_1 : f32 to vector<16x1xf32>
    %4 = arith.divf %2, %3 : vector<16x1xf32>
    %5 = arith.mulf %0, %0 : vector<16x32xf32>
    %cst_2 = arith.constant dense<0.000000e+00> : vector<16xf32>
    %6 = vector.multi_reduction <add>, %5, %cst_2 [1] : vector<16x32xf32> to vector<16xf32>
    %7 = vector.shape_cast %6 : vector<16xf32> to vector<16x1xf32>
    %cst_3 = arith.constant 3.200000e+01 : f32
    %8 = vector.broadcast %cst_3 : f32 to vector<16x1xf32>
    %9 = arith.divf %7, %8 : vector<16x1xf32>
    %10 = arith.mulf %4, %4 : vector<16x1xf32>
    %11 = arith.subf %9, %10 : vector<16x1xf32>
    %cst_4 = arith.constant 0.000000e+00 : f32
    %12 = vector.broadcast %cst_4 : f32 to vector<16x1xf32>
    %13 = arith.maximumf %11, %12 : vector<16x1xf32>
    %14 = vector.broadcast %4 : vector<16x1xf32> to vector<16x32xf32>
    %15 = arith.subf %0, %14 : vector<16x32xf32>
    %cst_5 = arith.constant 9.99999974E-6 : f32
    %16 = vector.broadcast %cst_5 : f32 to vector<16x1xf32>
    %17 = arith.addf %13, %16 : vector<16x1xf32>
    %18 = math.rsqrt %17 : vector<16x1xf32>
    %19 = vector.broadcast %18 : vector<16x1xf32> to vector<16x32xf32>
    %20 = arith.mulf %15, %19 : vector<16x32xf32>
    %c0_6 = arith.constant 0 : index
    %c0_7 = arith.constant 0 : index
    %21 = vector.load %arg2[%c0_6, %c0_7] : memref<1x32xbf16, #tpu.memory_space<vmem>>, vector<1x32xbf16>
    %22 = arith.extf %21 : vector<1x32xbf16> to vector<1x32xf32>
    %23 = vector.broadcast %22 : vector<1x32xf32> to vector<16x32xf32>
    %24 = arith.mulf %20, %23 : vector<16x32xf32>
    %c0_8 = arith.constant 0 : index
    %c0_9 = arith.constant 0 : index
    %25 = vector.load %arg3[%c0_8, %c0_9] : memref<1x32xbf16, #tpu.memory_space<vmem>>, vector<1x32xbf16>
    %26 = arith.extf %25 : vector<1x32xbf16> to vector<1x32xf32>
    %27 = vector.broadcast %26 : vector<1x32xf32> to vector<16x32xf32>
    %28 = arith.addf %24, %27 : vector<16x32xf32>
    %29 = arith.truncf %28 : vector<16x32xf32> to vector<16x32xbf16>
    %c0_10 = arith.constant 0 : index
    %c0_11 = arith.constant 0 : index
    %30 = vector.load %arg4[%c0_10, %c0_11] : memref<32x32xbf16, #tpu.memory_space<vmem>>, vector<32x32xbf16>
    %cst_12 = arith.constant dense<0.000000e+00> : vector<16x32xf32>
    %31 = tpu.matmul %29, %30, %cst_12 {dimension_numbers = #tpu.dot_dimension_numbers<[1], [0], [0], [1], [0, 0, 1, 1], [], []>} : vector<16x32xbf16>, vector<32x32xbf16>, vector<16x32xf32> -> vector<16x32xf32>
    %c0_13 = arith.constant 0 : index
    %c0_14 = arith.constant 0 : index
    %32 = vector.load %arg5[%c0_13, %c0_14] : memref<1x32xbf16, #tpu.memory_space<vmem>>, vector<1x32xbf16>
    %33 = arith.extf %32 : vector<1x32xbf16> to vector<1x32xf32>
    %34 = vector.broadcast %33 : vector<1x32xf32> to vector<16x32xf32>
    %35 = arith.addf %31, %34 : vector<16x32xf32>
    %cst_15 = arith.constant 0.353553385 : f32
    %36 = vector.broadcast %cst_15 : f32 to vector<16x32xf32>
    %37 = arith.mulf %35, %36 : vector<16x32xf32>
    %38 = arith.truncf %37 : vector<16x32xf32> to vector<16x32xbf16>
    %c0_16 = arith.constant 0 : index
    %c0_17 = arith.constant 0 : index
    %39 = vector.load %arg6[%c0_16, %c0_17] : memref<16x32xbf16, #tpu.memory_space<vmem>>, vector<16x32xbf16>
    tpu.vector_store %arg6[%c0_16, %c0_17], %38 {strides = array<i32>} : memref<16x32xbf16, #tpu.memory_space<vmem>>, vector<16x32xbf16>,
    return
  }
  func.func @transform_0(%arg0: i32) -> (i32, i32) {
    %c0_i32 = arith.constant 0 : i32
    %c0_i32_0 = arith.constant 0 : i32
    return %arg0, %c0_i32 : i32, i32
  }
  func.func @transform_1(%arg0: i32) -> (i32, i32) {
    %c0_i32 = arith.constant 0 : i32
    %c0_i32_0 = arith.constant 0 : i32
    %c0_i32_1 = arith.constant 0 : i32
    return %c0_i32, %c0_i32_0 : i32, i32
  }
  func.func @transform_2(%arg0: i32) -> (i32, i32) {
    %c0_i32 = arith.constant 0 : i32
    %c0_i32_0 = arith.constant 0 : i32
    %c0_i32_1 = arith.constant 0 : i32
    return %c0_i32, %c0_i32_0 : i32, i32
  }
  func.func @transform_3(%arg0: i32) -> (i32, i32) {
    %c0_i32 = arith.constant 0 : i32
    %c0_i32_0 = arith.constant 0 : i32
    %c0_i32_1 = arith.constant 0 : i32
    return %c0_i32, %c0_i32_0 : i32, i32
  }
  func.func @transform_4(%arg0: i32) -> (i32, i32) {
    %c0_i32 = arith.constant 0 : i32
    %c0_i32_0 = arith.constant 0 : i32
    %c0_i32_1 = arith.constant 0 : i32
    return %c0_i32, %c0_i32_0 : i32, i32
  }
  func.func @transform_5(%arg0: i32) -> (i32, i32) {
    %c0_i32 = arith.constant 0 : i32
    %c0_i32_0 = arith.constant 0 : i32
    return %arg0, %c0_i32 : i32, i32
  }
}

module attributes {stable_mosaic.version = 11 : i64} {
  func.func @_attn_kernel(%arg0: i32, %arg1: i32, %arg2: memref<1x4x8x8xbf16, #tpu.memory_space<vmem>>, %arg3: memref<1x4x8x8xbf16, #tpu.memory_space<vmem>>, %arg4: memref<4x8x32xbf16, #tpu.memory_space<vmem>>, %arg5: memref<1x32xbf16, #tpu.memory_space<vmem>>, %arg6: memref<1x8x32xf32, #tpu.memory_space<vmem>>, %arg7: memref<1x4x8x8xbf16, #tpu.memory_space<vmem>>) attributes {dimension_semantics = [#tpu.dimension_semantics<parallel>, #tpu.dimension_semantics<parallel>], iteration_bounds = array<i64: 2, 1>, scalar_prefetch = 0 : i64, scratch_operands = 0 : i64, tpu.core_type = #tpu.core_type<tc>, window_params = [{transform_indices = @transform_0, window_bounds = array<i64: 1, 4, 8, 8>}, {transform_indices = @transform_1, window_bounds = array<i64: 1, 4, 8, 8>}, {pipeline_mode = #tpu.pipeline_mode<synchronous>, transform_indices = @transform_2, window_bounds = array<i64: 4, 8, 32>}, {pipeline_mode = #tpu.pipeline_mode<synchronous>, transform_indices = @transform_3, window_bounds = array<i64: 1, 32>}, {transform_indices = @transform_4, window_bounds = array<i64: 1, 8, 32>}, {transform_indices = @transform_5, window_bounds = array<i64: 1, 4, 8, 8>}]} {
    %cst = arith.constant 0.000000e+00 : f32
    %0 = vector.broadcast %cst : f32 to vector<8x32xf32>
    %c0 = arith.constant 0 : index
    %c0_0 = arith.constant 0 : index
    %c0_1 = arith.constant 0 : index
    %c0_2 = arith.constant 0 : index
    %1 = vector.load %arg2[%c0, %c0_0, %c0_1, %c0_2] : memref<1x4x8x8xbf16, #tpu.memory_space<vmem>>, vector<1x1x8x8xbf16>
    %2 = vector.shape_cast %1 : vector<1x1x8x8xbf16> to vector<8x8xbf16>
    %c0_3 = arith.constant 0 : index
    %c0_4 = arith.constant 0 : index
    %c0_5 = arith.constant 0 : index
    %c0_6 = arith.constant 0 : index
    %3 = vector.load %arg3[%c0_3, %c0_4, %c0_5, %c0_6] : memref<1x4x8x8xbf16, #tpu.memory_space<vmem>>, vector<1x1x8x8xbf16>
    %4 = vector.shape_cast %3 : vector<1x1x8x8xbf16> to vector<8x8xbf16>
    %cst_7 = arith.constant dense<0.000000e+00> : vector<8x8xf32>
    %5 = tpu.matmul %2, %4, %cst_7 {dimension_numbers = #tpu.dot_dimension_numbers<[1], [1], [0], [0], [0, 0, 1, 0], [], []>} : vector<8x8xbf16>, vector<8x8xbf16>, vector<8x8xf32> -> vector<8x8xf32>
    %cst_8 = arith.constant dense<0xFF800000> : vector<8xf32>
    %6 = vector.multi_reduction <maximumf>, %5, %cst_8 [1] : vector<8x8xf32> to vector<8xf32>
    %7 = vector.shape_cast %6 : vector<8xf32> to vector<8x1xf32>
    %8 = vector.broadcast %7 : vector<8x1xf32> to vector<8x8xf32>
    %9 = arith.subf %5, %8 : vector<8x8xf32>
    %10 = math.exp %9 : vector<8x8xf32>
    %cst_9 = arith.constant dense<0.000000e+00> : vector<8xf32>
    %11 = vector.multi_reduction <add>, %10, %cst_9 [1] : vector<8x8xf32> to vector<8xf32>
    %12 = vector.shape_cast %11 : vector<8xf32> to vector<8x1xf32>
    %cst_10 = arith.constant 1.000000e+00 : f32
    %13 = vector.broadcast %cst_10 : f32 to vector<8x1xf32>
    %14 = arith.divf %13, %12 : vector<8x1xf32>
    %15 = vector.broadcast %14 : vector<8x1xf32> to vector<8x8xf32>
    %16 = arith.mulf %10, %15 : vector<8x8xf32>
    %17 = arith.truncf %16 : vector<8x8xf32> to vector<8x8xbf16>
    %c0_11 = arith.constant 0 : index
    %c0_12 = arith.constant 0 : index
    %c0_13 = arith.constant 0 : index
    %c0_14 = arith.constant 0 : index
    %18 = vector.load %arg7[%c0_11, %c0_12, %c0_13, %c0_14] : memref<1x4x8x8xbf16, #tpu.memory_space<vmem>>, vector<1x1x8x8xbf16>
    %19 = vector.shape_cast %18 : vector<1x1x8x8xbf16> to vector<8x8xbf16>
    %20 = vector.shape_cast %17 : vector<8x8xbf16> to vector<1x1x8x8xbf16>
    tpu.vector_store %arg7[%c0_11, %c0_12, %c0_13, %c0_14], %20 {strides = array<i32>} : memref<1x4x8x8xbf16, #tpu.memory_space<vmem>>, vector<1x1x8x8xbf16>,
    %21 = arith.truncf %16 : vector<8x8xf32> to vector<8x8xbf16>
    %cst_15 = arith.constant dense<0.000000e+00> : vector<8x8xf32>
    %22 = tpu.matmul %21, %4, %cst_15 {dimension_numbers = #tpu.dot_dimension_numbers<[1], [0], [0], [1], [0, 0, 1, 1], [], []>} : vector<8x8xbf16>, vector<8x8xbf16>, vector<8x8xf32> -> vector<8x8xf32>
    %23 = arith.truncf %22 : vector<8x8xf32> to vector<8x8xbf16>
    %c0_16 = arith.constant 0 : index
    %c0_17 = arith.constant 0 : index
    %c0_18 = arith.constant 0 : index
    %24 = vector.load %arg4[%c0_16, %c0_17, %c0_18] : memref<4x8x32xbf16, #tpu.memory_space<vmem>>, vector<1x8x32xbf16>
    %25 = vector.shape_cast %24 : vector<1x8x32xbf16> to vector<8x32xbf16>
    %cst_19 = arith.constant dense<0.000000e+00> : vector<8x32xf32>
    %26 = tpu.matmul %23, %25, %cst_19 {dimension_numbers = #tpu.dot_dimension_numbers<[1], [0], [0], [1], [0, 0, 1, 1], [], []>} : vector<8x8xbf16>, vector<8x32xbf16>, vector<8x32xf32> -> vector<8x32xf32>
    %27 = arith.addf %0, %26 : vector<8x32xf32>
    %c0_20 = arith.constant 0 : index
    %c1 = arith.constant 1 : index
    %c0_21 = arith.constant 0 : index
    %c0_22 = arith.constant 0 : index
    %28 = vector.load %arg2[%c0_20, %c1, %c0_21, %c0_22] : memref<1x4x8x8xbf16, #tpu.memory_space<vmem>>, vector<1x1x8x8xbf16>
    %29 = vector.shape_cast %28 : vector<1x1x8x8xbf16> to vector<8x8xbf16>
    %c0_23 = arith.constant 0 : index
    %c1_24 = arith.constant 1 : index
    %c0_25 = arith.constant 0 : index
    %c0_26 = arith.constant 0 : index
    %30 = vector.load %arg3[%c0_23, %c1_24, %c0_25, %c0_26] : memref<1x4x8x8xbf16, #tpu.memory_space<vmem>>, vector<1x1x8x8xbf16>
    %31 = vector.shape_cast %30 : vector<1x1x8x8xbf16> to vector<8x8xbf16>
    %cst_27 = arith.constant dense<0.000000e+00> : vector<8x8xf32>
    %32 = tpu.matmul %29, %31, %cst_27 {dimension_numbers = #tpu.dot_dimension_numbers<[1], [1], [0], [0], [0, 0, 1, 0], [], []>} : vector<8x8xbf16>, vector<8x8xbf16>, vector<8x8xf32> -> vector<8x8xf32>
    %cst_28 = arith.constant dense<0xFF800000> : vector<8xf32>
    %33 = vector.multi_reduction <maximumf>, %32, %cst_28 [1] : vector<8x8xf32> to vector<8xf32>
    %34 = vector.shape_cast %33 : vector<8xf32> to vector<8x1xf32>
    %35 = vector.broadcast %34 : vector<8x1xf32> to vector<8x8xf32>
    %36 = arith.subf %32, %35 : vector<8x8xf32>
    %37 = math.exp %36 : vector<8x8xf32>
    %cst_29 = arith.constant dense<0.000000e+00> : vector<8xf32>
    %38 = vector.multi_reduction <add>, %37, %cst_29 [1] : vector<8x8xf32> to vector<8xf32>
    %39 = vector.shape_cast %38 : vector<8xf32> to vector<8x1xf32>
    %cst_30 = arith.constant 1.000000e+00 : f32
    %40 = vector.broadcast %cst_30 : f32 to vector<8x1xf32>
    %41 = arith.divf %40, %39 : vector<8x1xf32>
    %42 = vector.broadcast %41 : vector<8x1xf32> to vector<8x8xf32>
    %43 = arith.mulf %37, %42 : vector<8x8xf32>
    %44 = arith.truncf %43 : vector<8x8xf32> to vector<8x8xbf16>
    %c0_31 = arith.constant 0 : index
    %c1_32 = arith.constant 1 : index
    %c0_33 = arith.constant 0 : index
    %c0_34 = arith.constant 0 : index
    %45 = vector.load %arg7[%c0_31, %c1_32, %c0_33, %c0_34] : memref<1x4x8x8xbf16, #tpu.memory_space<vmem>>, vector<1x1x8x8xbf16>
    %46 = vector.shape_cast %45 : vector<1x1x8x8xbf16> to vector<8x8xbf16>
    %47 = vector.shape_cast %44 : vector<8x8xbf16> to vector<1x1x8x8xbf16>
    tpu.vector_store %arg7[%c0_31, %c1_32, %c0_33, %c0_34], %47 {strides = array<i32>} : memref<1x4x8x8xbf16, #tpu.memory_space<vmem>>, vector<1x1x8x8xbf16>,
    %48 = arith.truncf %43 : vector<8x8xf32> to vector<8x8xbf16>
    %cst_35 = arith.constant dense<0.000000e+00> : vector<8x8xf32>
    %49 = tpu.matmul %48, %31, %cst_35 {dimension_numbers = #tpu.dot_dimension_numbers<[1], [0], [0], [1], [0, 0, 1, 1], [], []>} : vector<8x8xbf16>, vector<8x8xbf16>, vector<8x8xf32> -> vector<8x8xf32>
    %50 = arith.truncf %49 : vector<8x8xf32> to vector<8x8xbf16>
    %c1_36 = arith.constant 1 : index
    %c0_37 = arith.constant 0 : index
    %c0_38 = arith.constant 0 : index
    %51 = vector.load %arg4[%c1_36, %c0_37, %c0_38] : memref<4x8x32xbf16, #tpu.memory_space<vmem>>, vector<1x8x32xbf16>
    %52 = vector.shape_cast %51 : vector<1x8x32xbf16> to vector<8x32xbf16>
    %cst_39 = arith.constant dense<0.000000e+00> : vector<8x32xf32>
    %53 = tpu.matmul %50, %52, %cst_39 {dimension_numbers = #tpu.dot_dimension_numbers<[1], [0], [0], [1], [0, 0, 1, 1], [], []>} : vector<8x8xbf16>, vector<8x32xbf16>, vector<8x32xf32> -> vector<8x32xf32>
    %54 = arith.addf %27, %53 : vector<8x32xf32>
    %c0_40 = arith.constant 0 : index
    %c2 = arith.constant 2 : index
    %c0_41 = arith.constant 0 : index
    %c0_42 = arith.constant 0 : index
    %55 = vector.load %arg2[%c0_40, %c2, %c0_41, %c0_42] : memref<1x4x8x8xbf16, #tpu.memory_space<vmem>>, vector<1x1x8x8xbf16>
    %56 = vector.shape_cast %55 : vector<1x1x8x8xbf16> to vector<8x8xbf16>
    %c0_43 = arith.constant 0 : index
    %c2_44 = arith.constant 2 : index
    %c0_45 = arith.constant 0 : index
    %c0_46 = arith.constant 0 : index
    %57 = vector.load %arg3[%c0_43, %c2_44, %c0_45, %c0_46] : memref<1x4x8x8xbf16, #tpu.memory_space<vmem>>, vector<1x1x8x8xbf16>
    %58 = vector.shape_cast %57 : vector<1x1x8x8xbf16> to vector<8x8xbf16>
    %cst_47 = arith.constant dense<0.000000e+00> : vector<8x8xf32>
    %59 = tpu.matmul %56, %58, %cst_47 {dimension_numbers = #tpu.dot_dimension_numbers<[1], [1], [0], [0], [0, 0, 1, 0], [], []>} : vector<8x8xbf16>, vector<8x8xbf16>, vector<8x8xf32> -> vector<8x8xf32>
    %cst_48 = arith.constant dense<0xFF800000> : vector<8xf32>
    %60 = vector.multi_reduction <maximumf>, %59, %cst_48 [1] : vector<8x8xf32> to vector<8xf32>
    %61 = vector.shape_cast %60 : vector<8xf32> to vector<8x1xf32>
    %62 = vector.broadcast %61 : vector<8x1xf32> to vector<8x8xf32>
    %63 = arith.subf %59, %62 : vector<8x8xf32>
    %64 = math.exp %63 : vector<8x8xf32>
    %cst_49 = arith.constant dense<0.000000e+00> : vector<8xf32>
    %65 = vector.multi_reduction <add>, %64, %cst_49 [1] : vector<8x8xf32> to vector<8xf32>
    %66 = vector.shape_cast %65 : vector<8xf32> to vector<8x1xf32>
    %cst_50 = arith.constant 1.000000e+00 : f32
    %67 = vector.broadcast %cst_50 : f32 to vector<8x1xf32>
    %68 = arith.divf %67, %66 : vector<8x1xf32>
    %69 = vector.broadcast %68 : vector<8x1xf32> to vector<8x8xf32>
    %70 = arith.mulf %64, %69 : vector<8x8xf32>
    %71 = arith.truncf %70 : vector<8x8xf32> to vector<8x8xbf16>
    %c0_51 = arith.constant 0 : index
    %c2_52 = arith.constant 2 : index
    %c0_53 = arith.constant 0 : index
    %c0_54 = arith.constant 0 : index
    %72 = vector.load %arg7[%c0_51, %c2_52, %c0_53, %c0_54] : memref<1x4x8x8xbf16, #tpu.memory_space<vmem>>, vector<1x1x8x8xbf16>
    %73 = vector.shape_cast %72 : vector<1x1x8x8xbf16> to vector<8x8xbf16>
    %74 = vector.shape_cast %71 : vector<8x8xbf16> to vector<1x1x8x8xbf16>
    tpu.vector_store %arg7[%c0_51, %c2_52, %c0_53, %c0_54], %74 {strides = array<i32>} : memref<1x4x8x8xbf16, #tpu.memory_space<vmem>>, vector<1x1x8x8xbf16>,
    %75 = arith.truncf %70 : vector<8x8xf32> to vector<8x8xbf16>
    %cst_55 = arith.constant dense<0.000000e+00> : vector<8x8xf32>
    %76 = tpu.matmul %75, %58, %cst_55 {dimension_numbers = #tpu.dot_dimension_numbers<[1], [0], [0], [1], [0, 0, 1, 1], [], []>} : vector<8x8xbf16>, vector<8x8xbf16>, vector<8x8xf32> -> vector<8x8xf32>
    %77 = arith.truncf %76 : vector<8x8xf32> to vector<8x8xbf16>
    %c2_56 = arith.constant 2 : index
    %c0_57 = arith.constant 0 : index
    %c0_58 = arith.constant 0 : index
    %78 = vector.load %arg4[%c2_56, %c0_57, %c0_58] : memref<4x8x32xbf16, #tpu.memory_space<vmem>>, vector<1x8x32xbf16>
    %79 = vector.shape_cast %78 : vector<1x8x32xbf16> to vector<8x32xbf16>
    %cst_59 = arith.constant dense<0.000000e+00> : vector<8x32xf32>
    %80 = tpu.matmul %77, %79, %cst_59 {dimension_numbers = #tpu.dot_dimension_numbers<[1], [0], [0], [1], [0, 0, 1, 1], [], []>} : vector<8x8xbf16>, vector<8x32xbf16>, vector<8x32xf32> -> vector<8x32xf32>
    %81 = arith.addf %54, %80 : vector<8x32xf32>
    %c0_60 = arith.constant 0 : index
    %c3 = arith.constant 3 : index
    %c0_61 = arith.constant 0 : index
    %c0_62 = arith.constant 0 : index
    %82 = vector.load %arg2[%c0_60, %c3, %c0_61, %c0_62] : memref<1x4x8x8xbf16, #tpu.memory_space<vmem>>, vector<1x1x8x8xbf16>
    %83 = vector.shape_cast %82 : vector<1x1x8x8xbf16> to vector<8x8xbf16>
    %c0_63 = arith.constant 0 : index
    %c3_64 = arith.constant 3 : index
    %c0_65 = arith.constant 0 : index
    %c0_66 = arith.constant 0 : index
    %84 = vector.load %arg3[%c0_63, %c3_64, %c0_65, %c0_66] : memref<1x4x8x8xbf16, #tpu.memory_space<vmem>>, vector<1x1x8x8xbf16>
    %85 = vector.shape_cast %84 : vector<1x1x8x8xbf16> to vector<8x8xbf16>
    %cst_67 = arith.constant dense<0.000000e+00> : vector<8x8xf32>
    %86 = tpu.matmul %83, %85, %cst_67 {dimension_numbers = #tpu.dot_dimension_numbers<[1], [1], [0], [0], [0, 0, 1, 0], [], []>} : vector<8x8xbf16>, vector<8x8xbf16>, vector<8x8xf32> -> vector<8x8xf32>
    %cst_68 = arith.constant dense<0xFF800000> : vector<8xf32>
    %87 = vector.multi_reduction <maximumf>, %86, %cst_68 [1] : vector<8x8xf32> to vector<8xf32>
    %88 = vector.shape_cast %87 : vector<8xf32> to vector<8x1xf32>
    %89 = vector.broadcast %88 : vector<8x1xf32> to vector<8x8xf32>
    %90 = arith.subf %86, %89 : vector<8x8xf32>
    %91 = math.exp %90 : vector<8x8xf32>
    %cst_69 = arith.constant dense<0.000000e+00> : vector<8xf32>
    %92 = vector.multi_reduction <add>, %91, %cst_69 [1] : vector<8x8xf32> to vector<8xf32>
    %93 = vector.shape_cast %92 : vector<8xf32> to vector<8x1xf32>
    %cst_70 = arith.constant 1.000000e+00 : f32
    %94 = vector.broadcast %cst_70 : f32 to vector<8x1xf32>
    %95 = arith.divf %94, %93 : vector<8x1xf32>
    %96 = vector.broadcast %95 : vector<8x1xf32> to vector<8x8xf32>
    %97 = arith.mulf %91, %96 : vector<8x8xf32>
    %98 = arith.truncf %97 : vector<8x8xf32> to vector<8x8xbf16>
    %c0_71 = arith.constant 0 : index
    %c3_72 = arith.constant 3 : index
    %c0_73 = arith.constant 0 : index
    %c0_74 = arith.constant 0 : index
    %99 = vector.load %arg7[%c0_71, %c3_72, %c0_73, %c0_74] : memref<1x4x8x8xbf16, #tpu.memory_space<vmem>>, vector<1x1x8x8xbf16>
    %100 = vector.shape_cast %99 : vector<1x1x8x8xbf16> to vector<8x8xbf16>
    %101 = vector.shape_cast %98 : vector<8x8xbf16> to vector<1x1x8x8xbf16>
    tpu.vector_store %arg7[%c0_71, %c3_72, %c0_73, %c0_74], %101 {strides = array<i32>} : memref<1x4x8x8xbf16, #tpu.memory_space<vmem>>, vector<1x1x8x8xbf16>,
    %102 = arith.truncf %97 : vector<8x8xf32> to vector<8x8xbf16>
    %cst_75 = arith.constant dense<0.000000e+00> : vector<8x8xf32>
    %103 = tpu.matmul %102, %85, %cst_75 {dimension_numbers = #tpu.dot_dimension_numbers<[1], [0], [0], [1], [0, 0, 1, 1], [], []>} : vector<8x8xbf16>, vector<8x8xbf16>, vector<8x8xf32> -> vector<8x8xf32>
    %104 = arith.truncf %103 : vector<8x8xf32> to vector<8x8xbf16>
    %c3_76 = arith.constant 3 : index
    %c0_77 = arith.constant 0 : index
    %c0_78 = arith.constant 0 : index
    %105 = vector.load %arg4[%c3_76, %c0_77, %c0_78] : memref<4x8x32xbf16, #tpu.memory_space<vmem>>, vector<1x8x32xbf16>
    %106 = vector.shape_cast %105 : vector<1x8x32xbf16> to vector<8x32xbf16>
    %cst_79 = arith.constant dense<0.000000e+00> : vector<8x32xf32>
    %107 = tpu.matmul %104, %106, %cst_79 {dimension_numbers = #tpu.dot_dimension_numbers<[1], [0], [0], [1], [0, 0, 1, 1], [], []>} : vector<8x8xbf16>, vector<8x32xbf16>, vector<8x32xf32> -> vector<8x32xf32>
    %108 = arith.addf %81, %107 : vector<8x32xf32>
    %c0_80 = arith.constant 0 : index
    %c0_81 = arith.constant 0 : index
    %109 = vector.load %arg5[%c0_80, %c0_81] : memref<1x32xbf16, #tpu.memory_space<vmem>>, vector<1x32xbf16>
    %110 = arith.extf %109 : vector<1x32xbf16> to vector<1x32xf32>
    %111 = vector.broadcast %110 : vector<1x32xf32> to vector<8x32xf32>
    %112 = arith.addf %108, %111 : vector<8x32xf32>
    %c0_82 = arith.constant 0 : index
    %c0_83 = arith.constant 0 : index
    %c0_84 = arith.constant 0 : index
    %113 = vector.load %arg6[%c0_82, %c0_83, %c0_84] : memref<1x8x32xf32, #tpu.memory_space<vmem>>, vector<1x8x32xf32>
    %114 = vector.shape_cast %113 : vector<1x8x32xf32> to vector<8x32xf32>
    %115 = vector.shape_cast %112 : vector<8x32xf32> to vector<1x8x32xf32>
    tpu.vector_store %arg6[%c0_82, %c0_83, %c0_84], %115 {strides = array<i32>} : memref<1x8x32xf32, #tpu.memory_space<vmem>>, vector<1x8x32xf32>,
    return
  }
  func.func @transform_0(%arg0: i32, %arg1: i32) -> (i32, i32, i32, i32) {
    %c0_i32 = arith.constant 0 : i32
    %c0_i32_0 = arith.constant 0 : i32
    %c0_i32_1 = arith.constant 0 : i32
    return %arg0, %c0_i32, %arg1, %c0_i32_0 : i32, i32, i32, i32
  }
  func.func @transform_1(%arg0: i32, %arg1: i32) -> (i32, i32, i32, i32) {
    %c0_i32 = arith.constant 0 : i32
    %c0_i32_0 = arith.constant 0 : i32
    %c0_i32_1 = arith.constant 0 : i32
    %c0_i32_2 = arith.constant 0 : i32
    return %arg0, %c0_i32, %c0_i32_0, %c0_i32_1 : i32, i32, i32, i32
  }
  func.func @transform_2(%arg0: i32, %arg1: i32) -> (i32, i32, i32) {
    %c0_i32 = arith.constant 0 : i32
    %c0_i32_0 = arith.constant 0 : i32
    %c0_i32_1 = arith.constant 0 : i32
    %c0_i32_2 = arith.constant 0 : i32
    return %c0_i32, %c0_i32_0, %c0_i32_1 : i32, i32, i32
  }
  func.func @transform_3(%arg0: i32, %arg1: i32) -> (i32, i32) {
    %c0_i32 = arith.constant 0 : i32
    %c0_i32_0 = arith.constant 0 : i32
    %c0_i32_1 = arith.constant 0 : i32
    return %c0_i32, %c0_i32_0 : i32, i32
  }
  func.func @transform_4(%arg0: i32, %arg1: i32) -> (i32, i32, i32) {
    %c0_i32 = arith.constant 0 : i32
    %c0_i32_0 = arith.constant 0 : i32
    return %arg0, %arg1, %c0_i32 : i32, i32, i32
  }
  func.func @transform_5(%arg0: i32, %arg1: i32) -> (i32, i32, i32, i32) {
    %c0_i32 = arith.constant 0 : i32
    %c0_i32_0 = arith.constant 0 : i32
    %c0_i32_1 = arith.constant 0 : i32
    return %arg0, %c0_i32, %arg1, %c0_i32_0 : i32, i32, i32, i32
  }
}

</mosaic_0001>

<llo_original>
// kernel: source_attention_forward.3
$region0: #{source_attention_forward.3}
  #allocation0 [shape = 'u32[]', space=smem, size = 0x4, offset = 0x4, fixed_abs, tag = 'smem constant byte address 0x4 - core index']
  #allocation1 [shape = 'u32[144,128]{1,0:T(1,128)}', space=vmem, size = 0x12000, scoped, tag = 'internal scratch']
  %s0 = inlined_call_operand.hbm [shape: f32[16,32], index: 0, kind: input, shape index: {}]
  %s1 = inlined_call_operand.vmem [shape: bf16[1,32], index: 1, kind: input, shape index: {}]
  %s2 = inlined_call_operand.vmem [shape: bf16[1,32], index: 2, kind: input, shape index: {}, may-alias: {2,4}]
  %s3 = inlined_call_operand.vmem [shape: bf16[32,32], index: 3, kind: input, shape index: {}]
  %s4 = inlined_call_operand.vmem [shape: bf16[1,32], index: 4, kind: input, shape index: {}, may-alias: {2,4}]
  %s5 = inlined_call_operand.vmem [shape: bf16[16,32], index: 5, kind: output, shape index: {}]
  %s6 = sld [smem:[#allocation0]]
  $region34: #{source_attention_forward.3} parent=0
    _
  %s8 = ssub.s32 1, %s6
  %s9 = scalar_select 0, %s8, %s6
  $region1: #{source_attention_forward.3} parent=0
    #allocation2 [shape = 'u8[8192]{0}', space=vmem, size = 0x2000, scoped, tag = 'input window, operand 0, single buffered']
    #allocation3 [shape = 's32[1]{0}', space=sflag, size = 0x4, scoped, tag = 'scoped memory for source_attention_forward.3']
    %10 = vsyncpa [#allocation3], 0
    // Predicated region
    $region2: #{source_attention_forward.3} parent=1 // pred_check
      _
    $region3: #{source_attention_forward.3} parent=1 // pred_check_branch
      %12 = sbr.rel (0) target = $region5
    $region4: #{source_attention_forward.3} parent=1 // pred_region
      %s14 = ssub.s32 256, 256
      %15 = vsyncadd [#allocation3], %s14
      %s16 = sshll.u32 [#allocation2], 4
      %s17 = int_to_ptr.vmem [resolvable:$true] %s16
      %22 = dma.hbm_to_vmem [thread:$0]  %s0, 256, %s17, [#allocation3], 128, 128, 8
    $region5: #{source_attention_forward.3} parent=1 // pred_fallthru
      _
    // Predicated region
    $region6: #{source_attention_forward.3} parent=1 // pred_check
      _
    $region7: #{source_attention_forward.3} parent=1 // pred_check_branch
      %24 = sbr.rel (0) target = $region9
    $region8: #{source_attention_forward.3} parent=1 // pred_region
      _
    $region9: #{source_attention_forward.3} parent=1 // pred_fallthru
      _
    // Predicated region
    $region10: #{source_attention_forward.3} parent=1 // pred_check
      _
    $region11: #{source_attention_forward.3} parent=1 // pred_check_branch
      %26 = sbr.rel (0) target = $region13
    $region12: #{source_attention_forward.3} parent=1 // pred_region
      _
    $region13: #{source_attention_forward.3} parent=1 // pred_fallthru
      _
    // Predicated region
    $region14: #{source_attention_forward.3} parent=1 // pred_check
      _
    $region15: #{source_attention_forward.3} parent=1 // pred_check_branch
      %28 = sbr.rel (0) target = $region17
    $region16: #{source_attention_forward.3} parent=1 // pred_region
      _
    $region17: #{source_attention_forward.3} parent=1 // pred_fallthru
      _
    // Predicated region
    $region18: #{source_attention_forward.3} parent=1 // pred_check
      _
    $region19: #{source_attention_forward.3} parent=1 // pred_check_branch
      %30 = sbr.rel (0) target = $region21
    $region20: #{source_attention_forward.3} parent=1 // pred_region
      _
    $region21: #{source_attention_forward.3} parent=1 // pred_fallthru
      _
    // Predicated region
    $region22: #{source_attention_forward.3} parent=1 // pred_check
      _
    $region23: #{source_attention_forward.3} parent=1 // pred_check_branch
      %32 = sbr.rel (0) target = $region25
    $region24: #{source_attention_forward.3} parent=1 // pred_region
      %33 = dma.done [#allocation3], 256
    $region25: #{source_attention_forward.3} parent=1 // pred_fallthru
      _
    %v35 = vld [vmem:[#allocation2] sm:$0xff]
    %v36 = vld [vmem:[#allocation2 + $0x8] sm:$0xff]
    %vm37 = vcmask 261120
    %v38 = vsel %vm37, %v35, 0.0
    %39 = vadd.xlane.f32.xlu0 %v38
    %v40 = vpop.xlane.xlu0 %39
    %v41 = vsel %vm37, %v36, 0.0
    %42 = vadd.xlane.f32.xlu0 %v41
    %v43 = vpop.xlane.xlu0 %42
    %v44 = vrcp.pop 32.0
    %v45 = vmul.f32 %v40, %v44
    %v46 = vmul.f32 %v43, %v44
    %v47 = vmul.f32 %v35, %v35
    %v48 = vmul.f32 %v36, %v36
    %v49 = vsel %vm37, %v47, 0.0
    %50 = vadd.xlane.f32.xlu0 %v49
    %v51 = vpop.xlane.xlu0 %50
    %v52 = vsel %vm37, %v48, 0.0
    %53 = vadd.xlane.f32.xlu0 %v52
    %v54 = vpop.xlane.xlu0 %53
    %v55 = vmul.f32 %v51, %v44
    %v56 = vmul.f32 %v54, %v44
    %v57 = vmul.f32 %v45, %v45
    %v58 = vmul.f32 %v46, %v46
    %v59 = vsub.f32 %v55, %v57
    %v60 = vsub.f32 %v56, %v58
    %v61 = vmax.f32 %v59, 0.0
    %v62 = vmax.f32 %v60, 0.0
    %v63 = vsub.f32 %v35, %v45
    %v64 = vsub.f32 %v36, %v46
    %v65 = vadd.f32 %v61, 1e-05
    %v66 = vadd.f32 %v62, 1e-05
    %v67 = vrsqrt.pop %v65
    %v68 = vrsqrt.pop %v66
    %v69 = vmul.f32 %v63, %v67
    %v70 = vmul.f32 %v64, %v68
    %v71 = vld [vmem:[%s1] sm:$0x1]
    %v72 = vunpack.c.l.bf16 %v71
    %v73 = vlaneseq
    %v74 = vshrl.u32 %v73, 7
    %v75 = vsub.s32 0, %v74
    %v76 = vrot.slane %v72, %v75
    %v77 = vmul.f32 %v69, %v76
    %v78 = vmul.f32 %v70, %v76
    %v79 = vld [vmem:[%s2] sm:$0x1]
    %v80 = vunpack.c.l.bf16 %v79
    %v81 = vlaneseq
    %v82 = vshrl.u32 %v81, 7
    %v83 = vsub.s32 0, %v82
    %v84 = vrot.slane %v80, %v83
    %v85 = vadd.f32 %v77, %v84
    %v86 = vadd.f32 %v78, %v84
    %v87 = vpack.c.bf16 %v86, %v85
    %v88 = vld [vmem:[%s3] sm:$0xf]
    %v89 = vld [vmem:[%s3 + $0x4] sm:$0xf]
    %v90 = vld [vmem:[%s3 + $0x8] sm:$0xf]
    %v91 = vld [vmem:[%s3 + $0xc] sm:$0xf]
    %v92 = vld [vmem:[%s4] sm:$0x1]
    %v93 = vunpack.c.l.bf16 %v92
    %v94 = vlaneseq
    %v95 = vshrl.u32 %v94, 7
    %v96 = vsub.s32 0, %v95
    %v97 = vrot.slane %v93, %v96
    %v102 = vunpack.c.l.b16 %v88
    %v103 = vunpack.c.l.b16 %v89
    %v104 = vunpack.c.l.b16 %v90
    %v105 = vunpack.c.l.b16 %v91
    %v106 = vpack.c.b16 %v103, %v102
    %v107 = vpack.c.b16 %v105, %v104
    %v111 = vsel %vm37, %v87, 0
    %113 = vmatprep.subr.bf16.mxu0 0
    %114 = vmatpush1.bf16.msra.mxu0 0
    %115 = vmatprep.subr.bf16.mxu0 0
    %116 = vmatpush1.bf16.msra.mxu0 0
    %117 = vmatprep.subr.bf16.mxu0 0
    %118 = vmatpush1.bf16.msra.mxu0 0
    %119 = vmatprep.subr.bf16.mxu0 0
    %120 = vmatpush1.bf16.msra.mxu0 0
    %121 = vmatprep.subr.bf16.mxu0 0
    %122 = vmatpush1.bf16.msra.mxu0 0
    %123 = vmatprep.subr.bf16.mxu0 0
    %124 = vmatpush1.bf16.msra.mxu0 0
    %125 = vmatprep.subr.bf16.mxu0 0
    %126 = vmatpush1.bf16.msra.mxu0 %v107
    %127 = vmatprep.subr.bf16.mxu0 0
    %128 = vmatpush1.bf16.msra.mxu0 %v106
    %129 = vmatprep.subr.bf16.mxu0 0
    %130 = vmatpush2.bf16.msra.mxu0 0
    %131 = vmatprep.subr.bf16.mxu0 0
    %132 = vmatpush2.bf16.msra.mxu0 0
    %133 = vmatprep.subr.bf16.mxu0 0
    %134 = vmatpush2.bf16.msra.mxu0 0
    %135 = vmatprep.subr.bf16.mxu0 0
    %136 = vmatpush2.bf16.msra.mxu0 0
    %137 = vmatprep.subr.bf16.mxu0 0
    %138 = vmatpush2.bf16.msra.mxu0 0
    %139 = vmatprep.subr.bf16.mxu0 0
    %140 = vmatpush2.bf16.msra.mxu0 0
    %141 = vmatprep.subr.bf16.mxu0 0
    %142 = vmatpush2.bf16.msra.mxu0 0
    %143 = vmatprep.subr.bf16.mxu0 0
    %144 = vmatpush2.bf16.msra.mxu0 0
    %145 = vmatprep.mubr.bf16.mxu0 0
    %146 = vmatmul.mubr.bf16.gmra.mxu0 %v111
    %v147 = vpop.f32.mrf.mxu0
    %v148 = vadd.f32 %v97, %v147
    %v149 = vpop.f32.mrf.mxu0
    %v150 = vpop.f32.mrf.mxu0
    %v151 = vadd.f32 %v97, %v150
    %v152 = vpop.f32.mrf.mxu0
    %153 = vdwg.mxu0
    %v154 = vmul.f32 %v148, 0.35355338
    %v155 = vmul.f32 %v151, 0.35355338
    %v156 = vpack.c.bf16 %v155, %v154
    %v158 = vunpack.c.l.b16 %v156
    %v159 = vunpack.c.h.b16 %v156
    %v160 = vpack.c.b16 %v158, %v158
    %v161 = vpack.c.b16 %v159, %v159
    %vm164 = vcmask 257024
    %165 = vst.msk [vmem:[%s5] sm:$0xf] %vm164, %v160
    %166 = vst.msk [vmem:[%s5 + $0x4] sm:$0xf] %vm164, %v161
    // Predicated region
    $region26: #{source_attention_forward.3} parent=1 // pred_check
      _
    $region27: #{source_attention_forward.3} parent=1 // pred_check_branch
      %168 = sbr.rel (0) target = $region29
    $region28: #{source_attention_forward.3} parent=1 // pred_region
      _
    $region29: #{source_attention_forward.3} parent=1 // pred_fallthru
      _
    // Predicated region
    $region30: #{source_attention_forward.3} parent=1 // pred_check
      _
    $region31: #{source_attention_forward.3} parent=1 // pred_check_branch
      %170 = sbr.rel (0) target = $region33
    $region32: #{source_attention_forward.3} parent=1 // pred_region
      _
    $region33: #{source_attention_forward.3} parent=1 // pred_fallthru
      _
    %171 = vsyncpa [#allocation3], 1

// kernel: source_attention_forward.4
$region0: #{source_attention_forward.4}
  #allocation0 [shape = 'u32[]', space=smem, size = 0x4, offset = 0x4, fixed_abs, tag = 'smem constant byte address 0x4 - core index']
  #allocation1 [shape = 'u32[144,128]{1,0:T(1,128)}', space=vmem, size = 0x12000, scoped, tag = 'internal scratch']
  %s0 = inlined_call_operand.vmem [shape: f32[16,32], index: 0, kind: input, shape index: {}]
  %s1 = inlined_call_operand.vmem [shape: bf16[32,32], index: 1, kind: input, shape index: {}]
  %s2 = inlined_call_operand.vmem [shape: bf16[1,32], index: 2, kind: input, shape index: {}]
  %s3 = inlined_call_operand.vmem [shape: bf16[16,32], index: 3, kind: output, shape index: {}]
  %s4 = sld [smem:[#allocation0]]
  $region22: #{source_attention_forward.4} parent=0
    _
  %s6 = ssub.s32 1, %s4
  %s7 = scalar_select 0, %s6, %s4
  // Predicated region
  $region2: #{source_attention_forward.4} parent=0 // pred_check
    _
  $region3: #{source_attention_forward.4} parent=0 // pred_check_branch
    %9 = sbr.rel (0) target = $region5
  $region4: #{source_attention_forward.4} parent=0 // pred_region
    _
  $region5: #{source_attention_forward.4} parent=0 // pred_fallthru
    _
  // Predicated region
  $region6: #{source_attention_forward.4} parent=0 // pred_check
    _
  $region7: #{source_attention_forward.4} parent=0 // pred_check_branch
    %11 = sbr.rel (0) target = $region9
  $region8: #{source_attention_forward.4} parent=0 // pred_region
    _
  $region9: #{source_attention_forward.4} parent=0 // pred_fallthru
    _
  // Predicated region
  $region10: #{source_attention_forward.4} parent=0 // pred_check
    _
  $region11: #{source_attention_forward.4} parent=0 // pred_check_branch
    %13 = sbr.rel (0) target = $region13
  $region12: #{source_attention_forward.4} parent=0 // pred_region
    _
  $region13: #{source_attention_forward.4} parent=0 // pred_fallthru
    _
  %v15 = vld [vmem:[%s0] sm:$0xff]
  %v16 = vld [vmem:[%s0 + $0x8] sm:$0xff]
  %v17 = vpack.c.bf16 %v16, %v15
  %v18 = vld [vmem:[%s1] sm:$0xf]
  %v19 = vld [vmem:[%s1 + $0x4] sm:$0xf]
  %v20 = vld [vmem:[%s1 + $0x8] sm:$0xf]
  %v21 = vld [vmem:[%s1 + $0xc] sm:$0xf]
  %v22 = vld [vmem:[%s2] sm:$0x1]
  %v23 = vunpack.c.l.bf16 %v22
  %v24 = vlaneseq
  %v25 = vshrl.u32 %v24, 7
  %v26 = vsub.s32 0, %v25
  %v27 = vrot.slane %v23, %v26
  %v32 = vunpack.c.l.b16 %v18
  %v33 = vunpack.c.l.b16 %v19
  %v34 = vunpack.c.l.b16 %v20
  %v35 = vunpack.c.l.b16 %v21
  %v36 = vpack.c.b16 %v33, %v32
  %v37 = vpack.c.b16 %v35, %v34
  %vm40 = vcmask 261120
  %v42 = vsel %vm40, %v17, 0
  %44 = vmatprep.subr.bf16.mxu0 0
  %45 = vmatpush1.bf16.msra.mxu0 0
  %46 = vmatprep.subr.bf16.mxu0 0
  %47 = vmatpush1.bf16.msra.mxu0 0
  %48 = vmatprep.subr.bf16.mxu0 0
  %49 = vmatpush1.bf16.msra.mxu0 0
  %50 = vmatprep.subr.bf16.mxu0 0
  %51 = vmatpush1.bf16.msra.mxu0 0
  %52 = vmatprep.subr.bf16.mxu0 0
  %53 = vmatpush1.bf16.msra.mxu0 0
  %54 = vmatprep.subr.bf16.mxu0 0
  %55 = vmatpush1.bf16.msra.mxu0 0
  %56 = vmatprep.subr.bf16.mxu0 0
  %57 = vmatpush1.bf16.msra.mxu0 %v37
  %58 = vmatprep.subr.bf16.mxu0 0
  %59 = vmatpush1.bf16.msra.mxu0 %v36
  %60 = vmatprep.subr.bf16.mxu0 0
  %61 = vmatpush2.bf16.msra.mxu0 0
  %62 = vmatprep.subr.bf16.mxu0 0
  %63 = vmatpush2.bf16.msra.mxu0 0
  %64 = vmatprep.subr.bf16.mxu0 0
  %65 = vmatpush2.bf16.msra.mxu0 0
  %66 = vmatprep.subr.bf16.mxu0 0
  %67 = vmatpush2.bf16.msra.mxu0 0
  %68 = vmatprep.subr.bf16.mxu0 0
  %69 = vmatpush2.bf16.msra.mxu0 0
  %70 = vmatprep.subr.bf16.mxu0 0
  %71 = vmatpush2.bf16.msra.mxu0 0
  %72 = vmatprep.subr.bf16.mxu0 0
  %73 = vmatpush2.bf16.msra.mxu0 0
  %74 = vmatprep.subr.bf16.mxu0 0
  %75 = vmatpush2.bf16.msra.mxu0 0
  %76 = vmatprep.mubr.bf16.mxu0 0
  %77 = vmatmul.mubr.bf16.gmra.mxu0 %v42
  %v78 = vpop.f32.mrf.mxu0
  %v79 = vadd.f32 %v27, %v78
  %v80 = vpop.f32.mrf.mxu0
  %v81 = vpop.f32.mrf.mxu0
  %v82 = vadd.f32 %v27, %v81
  %v83 = vpop.f32.mrf.mxu0
  %84 = vdwg.mxu0
  %v85 = vpack.c.bf16 %v82, %v79
  %v87 = vunpack.c.l.b16 %v85
  %v88 = vunpack.c.h.b16 %v85
  %v89 = vpack.c.b16 %v87, %v87
  %v90 = vpack.c.b16 %v88, %v88
  %vm93 = vcmask 257024
  %94 = vst.msk [vmem:[%s3] sm:$0xf] %vm93, %v89
  %95 = vst.msk [vmem:[%s3 + $0x4] sm:$0xf] %vm93, %v90
  // Predicated region
  $region14: #{source_attention_forward.4} parent=0 // pred_check
    _
  $region15: #{source_attention_forward.4} parent=0 // pred_check_branch
    %97 = sbr.rel (0) target = $region17
  $region16: #{source_attention_forward.4} parent=0 // pred_region
    _
  $region17: #{source_attention_forward.4} parent=0 // pred_fallthru
    _
  // Predicated region
  $region18: #{source_attention_forward.4} parent=0 // pred_check
    _
  $region19: #{source_attention_forward.4} parent=0 // pred_check_branch
    %99 = sbr.rel (0) target = $region21
  $region20: #{source_attention_forward.4} parent=0 // pred_region
    _
  $region21: #{source_attention_forward.4} parent=0 // pred_fallthru
    _

// kernel: source_attention_forward.5
$region0: #{source_attention_forward.5}
  #allocation0 [shape = 'u32[]', space=smem, size = 0x4, offset = 0x4, fixed_abs, tag = 'smem constant byte address 0x4 - core index']
  #allocation1 [shape = 'u32[144,128]{1,0:T(1,128)}', space=vmem, size = 0x12000, scoped, tag = 'internal scratch']
  %s0 = inlined_call_operand.vmem [shape: bf16[2,4,8,8], index: 0, kind: input, shape index: {}]
  %s1 = inlined_call_operand.vmem [shape: bf16[2,4,8,8], index: 1, kind: input, shape index: {}]
  %s2 = inlined_call_operand.vmem [shape: bf16[4,8,32], index: 2, kind: input, shape index: {}]
  %s3 = inlined_call_operand.vmem [shape: bf16[1,32], index: 3, kind: input, shape index: {}]
  %s4 = inlined_call_operand.vmem [shape: f32[2,8,32], index: 4, kind: output, shape index: {0}]
  %s5 = inlined_call_operand.hbm [shape: bf16[2,4,8,8], index: 5, kind: output, shape index: {1}]
  %6 = xla_tuple %s4, %s5
  %s7 = sld [smem:[#allocation0]]
  $region57: #{source_attention_forward.5} parent=0
    _
  %s9 = ssub.s32 1, %s7
  %s10 = scalar_select 0, %s9, %s7
  $region1: #{source_attention_forward.5} parent=0
    #allocation2 [shape = 'u8[16384]{0}', space=vmem, size = 0x4000, scoped, tag = 'output window, operand 1']
    #allocation3 [shape = 's32[2]{0}', space=sflag, size = 0x8, scoped, tag = 'scoped memory for source_attention_forward.5']
    %11 = vsyncpa [#allocation3], 0
    %s12 = scalar_lea.sflag [#allocation3], 1
    %13 = vsyncpa %s12, 0
    loop: start=0, step=1, limit=4
    $region2: #{source_attention_forward.5} parent=1 // loop_pre_header
      _
    $region3: #{source_attention_forward.5} parent=1 // loop_header
      %s15 = sphi 0, %s19
      %p16 = scmp.ge.s32.totalorder %s15, 4
      %s22 = sphi 0, %s34
      %s23 = sphi 0, %s30
      %s24 = sphi 0, %s22
      %s25 = sphi 0, %s23
      %s26 = sphi 0, %s24
      %s27 = sphi 0, %s25
      %s39 = sphi 0, %s41
      %s42 = sphi 0, %s39
      %s43 = sphi 0, %s42
      %s59 = sphi 0, %s43
      %s65 = sphi 0, %s67
      %s68 = sphi 0, %s65
      %s69 = sphi 0, %s68
      %s85 = sphi 0, %s69
      %s89 = sphi 0, %s89
      %s91 = sphi 0, %s89
      %s92 = sphi 0, %s91
      %s106 = sphi 0, %s92
      %s110 = sphi 0, %s110
      %s112 = sphi 0, %s110
      %s113 = sphi 0, %s112
      %s127 = sphi 0, %s113
      %s135 = sphi 0, %s137
      %s138 = sphi 0, %s135
      %s139 = sphi 0, %s138
      %s155 = sphi 0, %s139
      %s163 = sphi 0, %s165
      %s166 = sphi 0, %s163
      %s167 = sphi 0, %s166
      %s183 = sphi 0, %s167
    $region4: #{source_attention_forward.5} parent=1 // loop_header_branch
      %18 = sbr.rel (%p16) target = $region8
    $region5: #{source_attention_forward.5} parent=1 // loop_body
      %s20 = ssub.s32 %s15, 1
      %s21 = ssub.s32 %s15, 2
      %s28 = sadd.s32 1, %s23
      %p29 = scmp.ge.s32.totalorder %s28, 1
      %s30 = scalar_select %p29, 0, %s28
      %s31 = sadd.s32 1, %s22
      %s32 = scalar_select %p29, %s31, %s22
      %p33 = scmp.ge.s32.totalorder %s32, 2
      %s34 = scalar_select %p33, 0, %s32
      %s35 = ssub.s32 %s22, %s34
      %s36 = ssub.s32 %s23, %s30
      %s37 = sor.u32 %s35, %s36
      %p38 = scmp.eq.s32.totalorder %s37, 0
      %s40 = sadd.s32 %s39, 1
      %s41 = scalar_select %p38, %s39, %s40
      %p44 = pneg %p38
      %p45 = scmp.eq.s32.totalorder %s15, 1
      %p46 = por %p44, %p45
      %p47 = scmp.ne.s32.totalorder %s39, %s42
      %p48 = scmp.eq.s32.totalorder %s15, 0
      %p49 = por %p47, %p48
      %p50 = scmp.ne.s32.totalorder %s39, %s42
      %p51 = scmp.eq.s32.totalorder %s20, 1
      %p52 = por %p50, %p51
      %p53 = scmp.ne.s32.totalorder %s42, %s43
      %p54 = scmp.eq.s32.totalorder %s20, 0
      %p55 = por %p53, %p54
      %p56 = scmp.ne.s32.totalorder %s42, %s43
      %p57 = scmp.eq.s32.totalorder %s21, 1
      %p58 = por %p56, %p57
      %p60 = scmp.ne.s32.totalorder %s43, %s59
      %p61 = scmp.eq.s32.totalorder %s21, 0
      %p62 = por %p60, %p61
      %s63 = ssub.s32 %s22, %s34
      %p64 = scmp.eq.s32.totalorder %s63, 0
      %s66 = sadd.s32 %s65, 1
      %s67 = scalar_select %p64, %s65, %s66
      %p70 = pneg %p64
      %p71 = scmp.eq.s32.totalorder %s15, 1
      %p72 = por %p70, %p71
      %p73 = scmp.ne.s32.totalorder %s65, %s68
      %p74 = scmp.eq.s32.totalorder %s15, 0
      %p75 = por %p73, %p74
      %p76 = scmp.ne.s32.totalorder %s65, %s68
      %p77 = scmp.eq.s32.totalorder %s20, 1
      %p78 = por %p76, %p77
      %p79 = scmp.ne.s32.totalorder %s68, %s69
      %p80 = scmp.eq.s32.totalorder %s20, 0
      %p81 = por %p79, %p80
      %p82 = scmp.ne.s32.totalorder %s68, %s69
      %p83 = scmp.eq.s32.totalorder %s21, 1
      %p84 = por %p82, %p83
      %p86 = scmp.ne.s32.totalorder %s69, %s85
      %p87 = scmp.eq.s32.totalorder %s21, 0
      %p88 = por %p86, %p87
      %s90 = sadd.s32 %s89, 1
      %p93 = scmp.eq.s32.totalorder %s15, 1
      %p94 = scmp.ne.s32.totalorder %s89, %s91
      %p95 = scmp.eq.s32.totalorder %s15, 0
      %p96 = por %p94, %p95
      %p97 = scmp.ne.s32.totalorder %s89, %s91
      %p98 = scmp.eq.s32.totalorder %s20, 1
      %p99 = por %p97, %p98
      %p100 = scmp.ne.s32.totalorder %s91, %s92
      %p101 = scmp.eq.s32.totalorder %s20, 0
      %p102 = por %p100, %p101
      %p103 = scmp.ne.s32.totalorder %s91, %s92
      %p104 = scmp.eq.s32.totalorder %s21, 1
      %p105 = por %p103, %p104
      %p107 = scmp.ne.s32.totalorder %s92, %s106
      %p108 = scmp.eq.s32.totalorder %s21, 0
      %p109 = por %p107, %p108
      %s111 = sadd.s32 %s110, 1
      %p114 = scmp.eq.s32.totalorder %s15, 1
      %p115 = scmp.ne.s32.totalorder %s110, %s112
      %p116 = scmp.eq.s32.totalorder %s15, 0
      %p117 = por %p115, %p116
      %p118 = scmp.ne.s32.totalorder %s110, %s112
      %p119 = scmp.eq.s32.totalorder %s20, 1
      %p120 = por %p118, %p119
      %p121 = scmp.ne.s32.totalorder %s112, %s113
      %p122 = scmp.eq.s32.totalorder %s20, 0
      %p123 = por %p121, %p122
      %p124 = scmp.ne.s32.totalorder %s112, %s113
      %p125 = scmp.eq.s32.totalorder %s21, 1
      %p126 = por %p124, %p125
      %p128 = scmp.ne.s32.totalorder %s113, %s127
      %p129 = scmp.eq.s32.totalorder %s21, 0
      %p130 = por %p128, %p129
      %s131 = ssub.s32 %s22, %s34
      %s132 = ssub.s32 %s23, %s30
      %s133 = sor.u32 %s131, %s132
      %p134 = scmp.eq.s32.totalorder %s133, 0
      %s136 = sadd.s32 %s135, 1
      %s137 = scalar_select %p134, %s135, %s136
      %p140 = pneg %p134
      %p141 = scmp.eq.s32.totalorder %s15, 1
      %p142 = por %p140, %p141
      %p143 = scmp.ne.s32.totalorder %s135, %s138
      %p144 = scmp.eq.s32.totalorder %s15, 0
      %p145 = por %p143, %p144
      %p146 = scmp.ne.s32.totalorder %s135, %s138
      %p147 = scmp.eq.s32.totalorder %s20, 1
      %p148 = por %p146, %p147
      %p149 = scmp.ne.s32.totalorder %s138, %s139
      %p150 = scmp.eq.s32.totalorder %s20, 0
      %p151 = por %p149, %p150
      %p152 = scmp.ne.s32.totalorder %s138, %s139
      %p153 = scmp.eq.s32.totalorder %s21, 1
      %p154 = por %p152, %p153
      %p156 = scmp.ne.s32.totalorder %s139, %s155
      %p157 = scmp.eq.s32.totalorder %s21, 0
      %p158 = por %p156, %p157
      %s159 = ssub.s32 %s22, %s34
      %s160 = ssub.s32 %s23, %s30
      %s161 = sor.u32 %s159, %s160
      %p162 = scmp.eq.s32.totalorder %s161, 0
      %s164 = sadd.s32 %s163, 1
      %s165 = scalar_select %p162, %s163, %s164
      %p168 = pneg %p162
      %p169 = scmp.eq.s32.totalorder %s15, 1
      %p170 = por %p168, %p169
      %p171 = scmp.ne.s32.totalorder %s163, %s166
      %p172 = scmp.eq.s32.totalorder %s15, 0
      %p173 = por %p171, %p172
      %p174 = scmp.ne.s32.totalorder %s163, %s166
      %p175 = scmp.eq.s32.totalorder %s20, 1
      %p176 = por %p174, %p175
      %p177 = scmp.ne.s32.totalorder %s166, %s167
      %p178 = scmp.eq.s32.totalorder %s20, 0
      %p179 = por %p177, %p178
      %p180 = scmp.ne.s32.totalorder %s166, %s167
      %p181 = scmp.eq.s32.totalorder %s21, 1
      %p182 = por %p180, %p181
      %p184 = scmp.ne.s32.totalorder %s167, %s183
      %p185 = scmp.eq.s32.totalorder %s21, 0
      %p186 = por %p184, %p185
      %p187 = scmp.le.s32.totalorder 1, %s15
      %p188 = scmp.lt.s32.totalorder %s15, 3
      %p189 = pnand %p187, %p188
      %p190 = pneg %p189
      // Predicated region
      $region9: #{source_attention_forward.5} parent=5 // pred_check
        _
      $region10: #{source_attention_forward.5} parent=5 // pred_check_branch
        %192 = sbr.rel (%p189) target = $region12
      $region11: #{source_attention_forward.5} parent=5 // pred_region
        %s193 = ssub.s32 %s15, 1
        // Predicated region
        $region13: #{source_attention_forward.5} parent=11 // pred_check
          %p194 = pneg %p102
        $region14: #{source_attention_forward.5} parent=11 // pred_check_branch
          %196 = sbr.rel (%p194) target = $region16
        $region15: #{source_attention_forward.5} parent=11 // pred_region
          _
        $region16: #{source_attention_forward.5} parent=11 // pred_fallthru
          _
        // Predicated region
        $region17: #{source_attention_forward.5} parent=11 // pred_check
          %p197 = pneg %p123
        $region18: #{source_attention_forward.5} parent=11 // pred_check_branch
          %199 = sbr.rel (%p197) target = $region20
        $region19: #{source_attention_forward.5} parent=11 // pred_region
          _
        $region20: #{source_attention_forward.5} parent=11 // pred_fallthru
          _
      $region12: #{source_attention_forward.5} parent=5 // pred_fallthru
        _
      %p200 = scmp.lt.s32.totalorder %s15, 2
      // Predicated region
      $region21: #{source_attention_forward.5} parent=5 // pred_check
        %p201 = pneg %p200
      $region22: #{source_attention_forward.5} parent=5 // pred_check_branch
        %203 = sbr.rel (%p201) target = $region24
      $region23: #{source_attention_forward.5} parent=5 // pred_region
        // Predicated region
        $region25: #{source_attention_forward.5} parent=23 // pred_check
          %p204 = pneg %p49
        $region26: #{source_attention_forward.5} parent=23 // pred_check_branch
          %206 = sbr.rel (%p204) target = $region28
        $region27: #{source_attention_forward.5} parent=23 // pred_region
          %p207 = scmp.lt.s32.totalorder %s22, 1
          %s208 = scalar_select %p207, %s22, 1
          %p209 = scmp.lt.s32.totalorder %s23, 0
          %s210 = scalar_select %p209, %s23, 0
          %s211 = smul.addr %s208, 4
          %s212 = sadd.s32 %s210, %s211
          %s213 = smul.addr %s212, 4
          %s214 = scalar_lea.vmem %s0, %s213
        $region28: #{source_attention_forward.5} parent=23 // pred_fallthru
          _
        // Predicated region
        $region29: #{source_attention_forward.5} parent=23 // pred_check
          %p215 = pneg %p75
        $region30: #{source_attention_forward.5} parent=23 // pred_check_branch
          %217 = sbr.rel (%p215) target = $region32
        $region31: #{source_attention_forward.5} parent=23 // pred_region
          %p218 = scmp.lt.s32.totalorder %s22, 1
          %s219 = scalar_select %p218, %s22, 1
          %s220 = smul.addr %s219, 4
          %s221 = smul.addr %s220, 4
          %s222 = scalar_lea.vmem %s1, %s221
        $region32: #{source_attention_forward.5} parent=23 // pred_fallthru
          _
      $region24: #{source_attention_forward.5} parent=5 // pred_fallthru
        _
      %p223 = scmp.le.s32.totalorder 1, %s15
      %p224 = scmp.lt.s32.totalorder %s15, 3
      %p225 = pnand %p223, %p224
      %p226 = pneg %p225
      // Predicated region
      $region33: #{source_attention_forward.5} parent=5 // pred_check
        _
      $region34: #{source_attention_forward.5} parent=5 // pred_check_branch
        %228 = sbr.rel (%p225) target = $region36
      $region35: #{source_attention_forward.5} parent=5 // pred_region
        %s229 = ssub.s32 %s15, 1
        %p230 = scmp.lt.s32.totalorder %s24, 1
        %s231 = scalar_select %p230, %s24, 1
        %p232 = scmp.lt.s32.totalorder %s25, 0
        %s233 = scalar_select %p232, %s25, 0
        %s234 = smul.addr %s231, 4
        %s235 = sadd.s32 %s233, %s234
        %s236 = smul.addr %s235, 4
        %s237 = scalar_lea.vmem %s0, %s236
        %p238 = pneg %p55
        %p239 = pneg %p52
        %p240 = scmp.lt.s32.totalorder %s24, 1
        %s241 = scalar_select %p240, %s24, 1
        %s242 = smul.addr %s241, 4
        %s243 = smul.addr %s242, 4
        %s244 = scalar_lea.vmem %s1, %s243
        %p245 = pneg %p81
        %p246 = pneg %p78
        %p247 = pneg %p102
        %p248 = pneg %p99
        %p249 = pneg %p123
        %p250 = pneg %p120
        %p251 = pneg %p151
        %p252 = pneg %p148
        %p253 = scmp.lt.s32.totalorder %s24, 1
        %s254 = scalar_select %p253, %s24, 1
        %p255 = scmp.lt.s32.totalorder %s25, 0
        %s256 = scalar_select %p255, %s25, 0
        %s257 = sadd.s32 %s256, %s254
        %s258 = smul.addr %s257, 8
        %s259 = scalar_lea.vmem %s4, %s258
        %p260 = pneg %p179
        %p261 = pneg %p176
        %s262 = sand.u32 %s166, 1
        %s263 = scalar_lea.sflag [#allocation3], %s262
        %s264 = sand.u32 %s166, 1
        %s265 = smul.addr %s264, 16
        %s266 = scalar_lea.vmem [#allocation2], %s265
        %p267 = scmp.lt.s32.totalorder %s24, 1
        %s268 = scalar_select %p267, %s24, 1
        %p269 = scmp.lt.s32.totalorder %s25, 0
        %s270 = scalar_select %p269, %s25, 0
        %s271 = smul.addr %s268, 4
        %s272 = sadd.s32 %s270, %s271
        %s273 = smul.addr %s272, 4
        %s274 = scalar_lea.vmem %s0, %s273
        %p275 = scmp.lt.s32.totalorder %s24, 1
        %s276 = scalar_select %p275, %s24, 1
        %s277 = smul.addr %s276, 4
        %s278 = smul.addr %s277, 4
        %s279 = scalar_lea.vmem %s1, %s278
        %p280 = scmp.lt.s32.totalorder %s24, 1
        %s281 = scalar_select %p280, %s24, 1
        %p282 = scmp.lt.s32.totalorder %s25, 0
        %s283 = scalar_select %p282, %s25, 0
        %s284 = sadd.s32 %s283, %s281
        %s285 = smul.addr %s284, 8
        %s286 = scalar_lea.vmem %s4, %s285
        %v288 = vld [vmem:[%s274] sm:$0xf]
        %v289 = vld [vmem:[%s279] sm:$0xf]
        %vm290 = vcmask 64512
        %v292 = vsel %vm290, %v288, 0
        %v295 = vsel %vm290, %v289, 0
        %297 = vmatprep.subr.bf16.mxu0 0
        %298 = vmatpush1.bf16.xpose.msra.mxu0 0
        %299 = vmatprep.subr.bf16.mxu0 0
        %300 = vmatpush1.bf16.xpose.msra.mxu0 0
        %301 = vmatprep.subr.bf16.mxu0 0
        %302 = vmatpush1.bf16.xpose.msra.mxu0 0
        %303 = vmatprep.subr.bf16.mxu0 0
        %304 = vmatpush1.bf16.xpose.msra.mxu0 0
        %305 = vmatprep.subr.bf16.mxu0 0
        %306 = vmatpush1.bf16.xpose.msra.mxu0 0
        %307 = vmatprep.subr.bf16.mxu0 0
        %308 = vmatpush1.bf16.xpose.msra.mxu0 0
        %309 = vmatprep.subr.bf16.mxu0 0
        %310 = vmatpush1.bf16.xpose.msra.mxu0 0
        %311 = vmatprep.subr.bf16.mxu0 0
        %312 = vmatpush1.bf16.xpose.msra.mxu0 %v295
        %313 = vmatprep.subr.bf16.mxu0 0
        %314 = vmatpush2.bf16.xpose.msra.mxu0 0
        %315 = vmatprep.subr.bf16.mxu0 0
        %316 = vmatpush2.bf16.xpose.msra.mxu0 0
        %317 = vmatprep.subr.bf16.mxu0 0
        %318 = vmatpush2.bf16.xpose.msra.mxu0 0
        %319 = vmatprep.subr.bf16.mxu0 0
        %320 = vmatpush2.bf16.xpose.msra.mxu0 0
        %321 = vmatprep.subr.bf16.mxu0 0
        %322 = vmatpush2.bf16.xpose.msra.mxu0 0
        %323 = vmatprep.subr.bf16.mxu0 0
        %324 = vmatpush2.bf16.xpose.msra.mxu0 0
        %325 = vmatprep.subr.bf16.mxu0 0
        %326 = vmatpush2.bf16.xpose.msra.mxu0 0
        %327 = vmatprep.subr.bf16.mxu0 0
        %328 = vmatpush2.bf16.xpose.msra.mxu0 0
        %329 = vmatprep.mubr.bf16.mxu0 0
        %330 = vmatmul.mubr.bf16.gmra.mxu0 %v292
        %v331 = vpop.f32.mrf.mxu0
        %v332 = vadd.f32 0.0, %v331
        %v333 = vpop.f32.mrf.mxu0
        %v334 = vpop.f32.mrf.mxu0
        %v335 = vpop.f32.mrf.mxu0
        %336 = vdwg.mxu0
        %v337 = vsel %vm290, %v332, -inf
        %338 = vmax.xlane.f32.xlu0 %v337
        %v339 = vpop.xlane.xlu0 %338
        %v340 = vsub.f32 %v332, %v339
        %v341 = vmul.f32 %v340, 1.442695
        %v342 = vpow.pop %v341
        %v343 = vsel %vm290, %v342, 0.0
        %344 = vadd.xlane.f32.xlu0 %v343
        %v345 = vpop.xlane.xlu0 %344
        %v346 = vrcp.pop %v345
        %v347 = vmul.f32 1.0, %v346
        %v348 = vmul.f32 %v342, %v347
        %v349 = vpack.c.bf16 %v348, %v348
        %vm350 = vcmask 60416
        %351 = vst.msk [vmem:[%s266] sm:$0xf] %vm350, %v349
        %v353 = vsel %vm290, %v349, 0
        %vm355 = vcmask 1043456
        %v356 = vsel %vm355, %v289, 0
        %358 = vmatprep.subr.bf16.mxu0 0
        %359 = vmatpush1.bf16.msra.mxu0 0
        %360 = vmatprep.subr.bf16.mxu0 0
        %361 = vmatpush1.bf16.msra.mxu0 0
        %362 = vmatprep.subr.bf16.mxu0 0
        %363 = vmatpush1.bf16.msra.mxu0 0
        %364 = vmatprep.subr.bf16.mxu0 0
        %365 = vmatpush1.bf16.msra.mxu0 0
        %366 = vmatprep.subr.bf16.mxu0 0
        %367 = vmatpush1.bf16.msra.mxu0 0
        %368 = vmatprep.subr.bf16.mxu0 0
        %369 = vmatpush1.bf16.msra.mxu0 0
        %370 = vmatprep.subr.bf16.mxu0 0
        %371 = vmatpush1.bf16.msra.mxu0 0
        %372 = vmatprep.subr.bf16.mxu0 0
        %373 = vmatpush1.bf16.msra.mxu0 %v356
        %374 = vmatprep.subr.bf16.mxu0 0
        %375 = vmatpush2.bf16.msra.mxu0 0
        %376 = vmatprep.subr.bf16.mxu0 0
        %377 = vmatpush2.bf16.msra.mxu0 0
        %378 = vmatprep.subr.bf16.mxu0 0
        %379 = vmatpush2.bf16.msra.mxu0 0
        %380 = vmatprep.subr.bf16.mxu0 0
        %381 = vmatpush2.bf16.msra.mxu0 0
        %382 = vmatprep.subr.bf16.mxu0 0
        %383 = vmatpush2.bf16.msra.mxu0 0
        %384 = vmatprep.subr.bf16.mxu0 0
        %385 = vmatpush2.bf16.msra.mxu0 0
        %386 = vmatprep.subr.bf16.mxu0 0
        %387 = vmatpush2.bf16.msra.mxu0 0
        %388 = vmatprep.subr.bf16.mxu0 0
        %389 = vmatpush2.bf16.msra.mxu0 0
        %390 = vmatprep.mubr.bf16.mxu0 0
        %391 = vmatmul.mubr.bf16.gmra.mxu0 %v353
        %v392 = vpop.f32.mrf.mxu0
        %v393 = vadd.f32 0.0, %v392
        %v394 = vpop.f32.mrf.mxu0
        %v395 = vpop.f32.mrf.mxu0
        %v396 = vpop.f32.mrf.mxu0
        %397 = vdwg.mxu0
        %v398 = vpack.c.bf16 %v393, %v393
        %v399 = vld [vmem:[%s2] sm:$0xf]
        %s400 = scalar_lea.vmem %s274, 4
        %v401 = vld [vmem:[%s400] sm:$0xf]
        %s402 = scalar_lea.vmem %s279, 4
        %v403 = vld [vmem:[%s402] sm:$0xf]
        %v405 = vsel %vm290, %v401, 0
        %v408 = vsel %vm290, %v403, 0
        %410 = vmatprep.subr.bf16.mxu0 0
        %411 = vmatpush1.bf16.xpose.msra.mxu0 0
        %412 = vmatprep.subr.bf16.mxu0 0
        %413 = vmatpush1.bf16.xpose.msra.mxu0 0
        %414 = vmatprep.subr.bf16.mxu0 0
        %415 = vmatpush1.bf16.xpose.msra.mxu0 0
        %416 = vmatprep.subr.bf16.mxu0 0
        %417 = vmatpush1.bf16.xpose.msra.mxu0 0
        %418 = vmatprep.subr.bf16.mxu0 0
        %419 = vmatpush1.bf16.xpose.msra.mxu0 0
        %420 = vmatprep.subr.bf16.mxu0 0
        %421 = vmatpush1.bf16.xpose.msra.mxu0 0
        %422 = vmatprep.subr.bf16.mxu0 0
        %423 = vmatpush1.bf16.xpose.msra.mxu0 0
        %424 = vmatprep.subr.bf16.mxu0 0
        %425 = vmatpush1.bf16.xpose.msra.mxu0 %v408
        %426 = vmatprep.subr.bf16.mxu0 0
        %427 = vmatpush2.bf16.xpose.msra.mxu0 0
        %428 = vmatprep.subr.bf16.mxu0 0
        %429 = vmatpush2.bf16.xpose.msra.mxu0 0
        %430 = vmatprep.subr.bf16.mxu0 0
        %431 = vmatpush2.bf16.xpose.msra.mxu0 0
        %432 = vmatprep.subr.bf16.mxu0 0
        %433 = vmatpush2.bf16.xpose.msra.mxu0 0
        %434 = vmatprep.subr.bf16.mxu0 0
        %435 = vmatpush2.bf16.xpose.msra.mxu0 0
        %436 = vmatprep.subr.bf16.mxu0 0
        %437 = vmatpush2.bf16.xpose.msra.mxu0 0
        %438 = vmatprep.subr.bf16.mxu0 0
        %439 = vmatpush2.bf16.xpose.msra.mxu0 0
        %440 = vmatprep.subr.bf16.mxu0 0
        %441 = vmatpush2.bf16.xpose.msra.mxu0 0
        %442 = vmatprep.mubr.bf16.mxu0 0
        %443 = vmatmul.mubr.bf16.gmra.mxu0 %v405
        %v444 = vpop.f32.mrf.mxu0
        %v445 = vadd.f32 0.0, %v444
        %v446 = vpop.f32.mrf.mxu0
        %v447 = vpop.f32.mrf.mxu0
        %v448 = vpop.f32.mrf.mxu0
        %449 = vdwg.mxu0
        %v450 = vsel %vm290, %v445, -inf
        %451 = vmax.xlane.f32.xlu0 %v450
        %v452 = vpop.xlane.xlu0 %451
        %v453 = vsub.f32 %v445, %v452
        %v454 = vmul.f32 %v453, 1.442695
        %v455 = vpow.pop %v454
        %v456 = vsel %vm290, %v455, 0.0
        %457 = vadd.xlane.f32.xlu0 %v456
        %v458 = vpop.xlane.xlu0 %457
        %v459 = vrcp.pop %v458
        %v460 = vmul.f32 1.0, %v459
        %v461 = vmul.f32 %v455, %v460
        %v462 = vpack.c.bf16 %v461, %v461
        %s463 = scalar_lea.vmem %s266, 4 [#allocation2]
        %464 = vst.msk [vmem:[%s463] sm:$0xf] %vm350, %v462
        %v466 = vsel %vm290, %v462, 0
        %v468 = vsel %vm355, %v403, 0
        %470 = vmatprep.subr.bf16.mxu0 0
        %471 = vmatpush1.bf16.msra.mxu0 0
        %472 = vmatprep.subr.bf16.mxu0 0
        %473 = vmatpush1.bf16.msra.mxu0 0
        %474 = vmatprep.subr.bf16.mxu0 0
        %475 = vmatpush1.bf16.msra.mxu0 0
        %476 = vmatprep.subr.bf16.mxu0 0
        %477 = vmatpush1.bf16.msra.mxu0 0
        %478 = vmatprep.subr.bf16.mxu0 0
        %479 = vmatpush1.bf16.msra.mxu0 0
        %480 = vmatprep.subr.bf16.mxu0 0
        %481 = vmatpush1.bf16.msra.mxu0 0
        %482 = vmatprep.subr.bf16.mxu0 0
        %483 = vmatpush1.bf16.msra.mxu0 0
        %484 = vmatprep.subr.bf16.mxu0 0
        %485 = vmatpush1.bf16.msra.mxu0 %v468
        %486 = vmatprep.subr.bf16.mxu0 0
        %487 = vmatpush2.bf16.msra.mxu0 0
        %488 = vmatprep.subr.bf16.mxu0 0
        %489 = vmatpush2.bf16.msra.mxu0 0
        %490 = vmatprep.subr.bf16.mxu0 0
        %491 = vmatpush2.bf16.msra.mxu0 0
        %492 = vmatprep.subr.bf16.mxu0 0
        %493 = vmatpush2.bf16.msra.mxu0 0
        %494 = vmatprep.subr.bf16.mxu0 0
        %495 = vmatpush2.bf16.msra.mxu0 0
        %496 = vmatprep.subr.bf16.mxu0 0
        %497 = vmatpush2.bf16.msra.mxu0 0
        %498 = vmatprep.subr.bf16.mxu0 0
        %499 = vmatpush2.bf16.msra.mxu0 0
        %500 = vmatprep.subr.bf16.mxu0 0
        %501 = vmatpush2.bf16.msra.mxu0 0
        %502 = vmatprep.mubr.bf16.mxu0 0
        %503 = vmatmul.mubr.bf16.gmra.mxu0 %v466
        %v504 = vpop.f32.mrf.mxu0
        %v505 = vadd.f32 0.0, %v504
        %v506 = vpop.f32.mrf.mxu0
        %v507 = vpop.f32.mrf.mxu0
        %v508 = vpop.f32.mrf.mxu0
        %509 = vdwg.mxu0
        %v510 = vpack.c.bf16 %v505, %v505
        %s511 = scalar_lea.vmem %s2, 4
        %v512 = vld [vmem:[%s511] sm:$0xf]
        %v514 = vsel %vm290, %v510, 0
        %v517 = vsel %vm355, %v512, 0
        %519 = vmatprep.subr.bf16.mxu0 0
        %520 = vmatpush1.bf16.msra.mxu0 0
        %521 = vmatprep.subr.bf16.mxu0 0
        %522 = vmatpush1.bf16.msra.mxu0 0
        %523 = vmatprep.subr.bf16.mxu0 0
        %524 = vmatpush1.bf16.msra.mxu0 0
        %525 = vmatprep.subr.bf16.mxu0 0
        %526 = vmatpush1.bf16.msra.mxu0 0
        %527 = vmatprep.subr.bf16.mxu0 0
        %528 = vmatpush1.bf16.msra.mxu0 0
        %529 = vmatprep.subr.bf16.mxu0 0
        %530 = vmatpush1.bf16.msra.mxu0 0
        %531 = vmatprep.subr.bf16.mxu0 0
        %532 = vmatpush1.bf16.msra.mxu0 0
        %533 = vmatprep.subr.bf16.mxu0 0
        %534 = vmatpush1.bf16.msra.mxu0 %v517
        %535 = vmatprep.subr.bf16.mxu0 0
        %536 = vmatpush2.bf16.msra.mxu0 0
        %537 = vmatprep.subr.bf16.mxu0 0
        %538 = vmatpush2.bf16.msra.mxu0 0
        %539 = vmatprep.subr.bf16.mxu0 0
        %540 = vmatpush2.bf16.msra.mxu0 0
        %541 = vmatprep.subr.bf16.mxu0 0
        %542 = vmatpush2.bf16.msra.mxu0 0
        %543 = vmatprep.subr.bf16.mxu0 0
        %544 = vmatpush2.bf16.msra.mxu0 0
        %545 = vmatprep.subr.bf16.mxu0 0
        %546 = vmatpush2.bf16.msra.mxu0 0
        %547 = vmatprep.subr.bf16.mxu0 0
        %548 = vmatpush2.bf16.msra.mxu0 0
        %549 = vmatprep.subr.bf16.mxu0 0
        %550 = vmatpush2.bf16.msra.mxu0 0
        %551 = vmatprep.mubr.bf16.mxu0 0
        %552 = vmatmul.mubr.bf16.gmra.mxu0 %v514
        %v553 = vpop.f32.mrf.mxu0
        %v554 = vadd.f32 0.0, %v553
        %v555 = vpop.f32.mrf.mxu0
        %v556 = vpop.f32.mrf.mxu0
        %v557 = vpop.f32.mrf.mxu0
        %558 = vdwg.mxu0
        %v560 = vsel %vm290, %v398, 0
        %v563 = vsel %vm355, %v399, 0
        %565 = vmatprep.subr.bf16.mxu0 0
        %566 = vmatpush1.bf16.msra.mxu0 0
        %567 = vmatprep.subr.bf16.mxu0 0
        %568 = vmatpush1.bf16.msra.mxu0 0
        %569 = vmatprep.subr.bf16.mxu0 0
        %570 = vmatpush1.bf16.msra.mxu0 0
        %571 = vmatprep.subr.bf16.mxu0 0
        %572 = vmatpush1.bf16.msra.mxu0 0
        %573 = vmatprep.subr.bf16.mxu0 0
        %574 = vmatpush1.bf16.msra.mxu0 0
        %575 = vmatprep.subr.bf16.mxu0 0
        %576 = vmatpush1.bf16.msra.mxu0 0
        %577 = vmatprep.subr.bf16.mxu0 0
        %578 = vmatpush1.bf16.msra.mxu0 0
        %579 = vmatprep.subr.bf16.mxu0 0
        %580 = vmatpush1.bf16.msra.mxu0 %v563
        %581 = vmatprep.subr.bf16.mxu0 0
        %582 = vmatpush2.bf16.msra.mxu0 0
        %583 = vmatprep.subr.bf16.mxu0 0
        %584 = vmatpush2.bf16.msra.mxu0 0
        %585 = vmatprep.subr.bf16.mxu0 0
        %586 = vmatpush2.bf16.msra.mxu0 0
        %587 = vmatprep.subr.bf16.mxu0 0
        %588 = vmatpush2.bf16.msra.mxu0 0
        %589 = vmatprep.subr.bf16.mxu0 0
        %590 = vmatpush2.bf16.msra.mxu0 0
        %591 = vmatprep.subr.bf16.mxu0 0
        %592 = vmatpush2.bf16.msra.mxu0 0
        %593 = vmatprep.subr.bf16.mxu0 0
        %594 = vmatpush2.bf16.msra.mxu0 0
        %595 = vmatprep.subr.bf16.mxu0 0
        %596 = vmatpush2.bf16.msra.mxu0 0
        %597 = vmatprep.mubr.bf16.mxu0 0
        %598 = vmatmul.mubr.bf16.gmra.mxu0 %v560
        %v599 = vpop.f32.mrf.mxu0
        %v600 = vadd.f32 %v554, %v599
        %v601 = vpop.f32.mrf.mxu0
        %v602 = vpop.f32.mrf.mxu0
        %v603 = vpop.f32.mrf.mxu0
        %604 = vdwg.mxu0
        %s605 = scalar_lea.vmem %s274, 8
        %v606 = vld [vmem:[%s605] sm:$0xf]
        %s607 = scalar_lea.vmem %s279, 8
        %v608 = vld [vmem:[%s607] sm:$0xf]
        %v610 = vsel %vm290, %v606, 0
        %v613 = vsel %vm290, %v608, 0
        %615 = vmatprep.subr.bf16.mxu0 0
        %616 = vmatpush1.bf16.xpose.msra.mxu0 0
        %617 = vmatprep.subr.bf16.mxu0 0
        %618 = vmatpush1.bf16.xpose.msra.mxu0 0
        %619 = vmatprep.subr.bf16.mxu0 0
        %620 = vmatpush1.bf16.xpose.msra.mxu0 0
        %621 = vmatprep.subr.bf16.mxu0 0
        %622 = vmatpush1.bf16.xpose.msra.mxu0 0
        %623 = vmatprep.subr.bf16.mxu0 0
        %624 = vmatpush1.bf16.xpose.msra.mxu0 0
        %625 = vmatprep.subr.bf16.mxu0 0
        %626 = vmatpush1.bf16.xpose.msra.mxu0 0
        %627 = vmatprep.subr.bf16.mxu0 0
        %628 = vmatpush1.bf16.xpose.msra.mxu0 0
        %629 = vmatprep.subr.bf16.mxu0 0
        %630 = vmatpush1.bf16.xpose.msra.mxu0 %v613
        %631 = vmatprep.subr.bf16.mxu0 0
        %632 = vmatpush2.bf16.xpose.msra.mxu0 0
        %633 = vmatprep.subr.bf16.mxu0 0
        %634 = vmatpush2.bf16.xpose.msra.mxu0 0
        %635 = vmatprep.subr.bf16.mxu0 0
        %636 = vmatpush2.bf16.xpose.msra.mxu0 0
        %637 = vmatprep.subr.bf16.mxu0 0
        %638 = vmatpush2.bf16.xpose.msra.mxu0 0
        %639 = vmatprep.subr.bf16.mxu0 0
        %640 = vmatpush2.bf16.xpose.msra.mxu0 0
        %641 = vmatprep.subr.bf16.mxu0 0
        %642 = vmatpush2.bf16.xpose.msra.mxu0 0
        %643 = vmatprep.subr.bf16.mxu0 0
        %644 = vmatpush2.bf16.xpose.msra.mxu0 0
        %645 = vmatprep.subr.bf16.mxu0 0
        %646 = vmatpush2.bf16.xpose.msra.mxu0 0
        %647 = vmatprep.mubr.bf16.mxu0 0
        %648 = vmatmul.mubr.bf16.gmra.mxu0 %v610
        %v649 = vpop.f32.mrf.mxu0
        %v650 = vadd.f32 0.0, %v649
        %v651 = vpop.f32.mrf.mxu0
        %v652 = vpop.f32.mrf.mxu0
        %v653 = vpop.f32.mrf.mxu0
        %654 = vdwg.mxu0
        %v655 = vsel %vm290, %v650, -inf
        %656 = vmax.xlane.f32.xlu0 %v655
        %v657 = vpop.xlane.xlu0 %656
        %v658 = vsub.f32 %v650, %v657
        %v659 = vmul.f32 %v658, 1.442695
        %v660 = vpow.pop %v659
        %v661 = vsel %vm290, %v660, 0.0
        %662 = vadd.xlane.f32.xlu0 %v661
        %v663 = vpop.xlane.xlu0 %662
        %v664 = vrcp.pop %v663
        %v665 = vmul.f32 1.0, %v664
        %v666 = vmul.f32 %v660, %v665
        %v667 = vpack.c.bf16 %v666, %v666
        %s668 = scalar_lea.vmem %s266, 8 [#allocation2]
        %669 = vst.msk [vmem:[%s668] sm:$0xf] %vm350, %v667
        %v671 = vsel %vm290, %v667, 0
        %v673 = vsel %vm355, %v608, 0
        %675 = vmatprep.subr.bf16.mxu0 0
        %676 = vmatpush1.bf16.msra.mxu0 0
        %677 = vmatprep.subr.bf16.mxu0 0
        %678 = vmatpush1.bf16.msra.mxu0 0
        %679 = vmatprep.subr.bf16.mxu0 0
        %680 = vmatpush1.bf16.msra.mxu0 0
        %681 = vmatprep.subr.bf16.mxu0 0
        %682 = vmatpush1.bf16.msra.mxu0 0
        %683 = vmatprep.subr.bf16.mxu0 0
        %684 = vmatpush1.bf16.msra.mxu0 0
        %685 = vmatprep.subr.bf16.mxu0 0
        %686 = vmatpush1.bf16.msra.mxu0 0
        %687 = vmatprep.subr.bf16.mxu0 0
        %688 = vmatpush1.bf16.msra.mxu0 0
        %689 = vmatprep.subr.bf16.mxu0 0
        %690 = vmatpush1.bf16.msra.mxu0 %v673
        %691 = vmatprep.subr.bf16.mxu0 0
        %692 = vmatpush2.bf16.msra.mxu0 0
        %693 = vmatprep.subr.bf16.mxu0 0
        %694 = vmatpush2.bf16.msra.mxu0 0
        %695 = vmatprep.subr.bf16.mxu0 0
        %696 = vmatpush2.bf16.msra.mxu0 0
        %697 = vmatprep.subr.bf16.mxu0 0
        %698 = vmatpush2.bf16.msra.mxu0 0
        %699 = vmatprep.subr.bf16.mxu0 0
        %700 = vmatpush2.bf16.msra.mxu0 0
        %701 = vmatprep.subr.bf16.mxu0 0
        %702 = vmatpush2.bf16.msra.mxu0 0
        %703 = vmatprep.subr.bf16.mxu0 0
        %704 = vmatpush2.bf16.msra.mxu0 0
        %705 = vmatprep.subr.bf16.mxu0 0
        %706 = vmatpush2.bf16.msra.mxu0 0
        %707 = vmatprep.mubr.bf16.mxu0 0
        %708 = vmatmul.mubr.bf16.gmra.mxu0 %v671
        %v709 = vpop.f32.mrf.mxu0
        %v710 = vadd.f32 0.0, %v709
        %v711 = vpop.f32.mrf.mxu0
        %v712 = vpop.f32.mrf.mxu0
        %v713 = vpop.f32.mrf.mxu0
        %714 = vdwg.mxu0
        %v715 = vpack.c.bf16 %v710, %v710
        %s716 = scalar_lea.vmem %s2, 8
        %v717 = vld [vmem:[%s716] sm:$0xf]
        %v719 = vsel %vm290, %v715, 0
        %v722 = vsel %vm355, %v717, 0
        %724 = vmatprep.subr.bf16.mxu0 0
        %725 = vmatpush1.bf16.msra.mxu0 0
        %726 = vmatprep.subr.bf16.mxu0 0
        %727 = vmatpush1.bf16.msra.mxu0 0
        %728 = vmatprep.subr.bf16.mxu0 0
        %729 = vmatpush1.bf16.msra.mxu0 0
        %730 = vmatprep.subr.bf16.mxu0 0
        %731 = vmatpush1.bf16.msra.mxu0 0
        %732 = vmatprep.subr.bf16.mxu0 0
        %733 = vmatpush1.bf16.msra.mxu0 0
        %734 = vmatprep.subr.bf16.mxu0 0
        %735 = vmatpush1.bf16.msra.mxu0 0
        %736 = vmatprep.subr.bf16.mxu0 0
        %737 = vmatpush1.bf16.msra.mxu0 0
        %738 = vmatprep.subr.bf16.mxu0 0
        %739 = vmatpush1.bf16.msra.mxu0 %v722
        %740 = vmatprep.subr.bf16.mxu0 0
        %741 = vmatpush2.bf16.msra.mxu0 0
        %742 = vmatprep.subr.bf16.mxu0 0
        %743 = vmatpush2.bf16.msra.mxu0 0
        %744 = vmatprep.subr.bf16.mxu0 0
        %745 = vmatpush2.bf16.msra.mxu0 0
        %746 = vmatprep.subr.bf16.mxu0 0
        %747 = vmatpush2.bf16.msra.mxu0 0
        %748 = vmatprep.subr.bf16.mxu0 0
        %749 = vmatpush2.bf16.msra.mxu0 0
        %750 = vmatprep.subr.bf16.mxu0 0
        %751 = vmatpush2.bf16.msra.mxu0 0
        %752 = vmatprep.subr.bf16.mxu0 0
        %753 = vmatpush2.bf16.msra.mxu0 0
        %754 = vmatprep.subr.bf16.mxu0 0
        %755 = vmatpush2.bf16.msra.mxu0 0
        %756 = vmatprep.mubr.bf16.mxu0 0
        %757 = vmatmul.mubr.bf16.gmra.mxu0 %v719
        %v758 = vpop.f32.mrf.mxu0
        %v759 = vadd.f32 0.0, %v758
        %v760 = vpop.f32.mrf.mxu0
        %v761 = vpop.f32.mrf.mxu0
        %v762 = vpop.f32.mrf.mxu0
        %763 = vdwg.mxu0
        %v764 = vadd.f32 %v600, %v759
        %s765 = scalar_lea.vmem %s274, 12
        %v766 = vld [vmem:[%s765] sm:$0xf]
        %s767 = scalar_lea.vmem %s279, 12
        %v768 = vld [vmem:[%s767] sm:$0xf]
        %v770 = vsel %vm290, %v766, 0
        %v773 = vsel %vm290, %v768, 0
        %775 = vmatprep.subr.bf16.mxu0 0
        %776 = vmatpush1.bf16.xpose.msra.mxu0 0
        %777 = vmatprep.subr.bf16.mxu0 0
        %778 = vmatpush1.bf16.xpose.msra.mxu0 0
        %779 = vmatprep.subr.bf16.mxu0 0
        %780 = vmatpush1.bf16.xpose.msra.mxu0 0
        %781 = vmatprep.subr.bf16.mxu0 0
        %782 = vmatpush1.bf16.xpose.msra.mxu0 0
        %783 = vmatprep.subr.bf16.mxu0 0
        %784 = vmatpush1.bf16.xpose.msra.mxu0 0
        %785 = vmatprep.subr.bf16.mxu0 0
        %786 = vmatpush1.bf16.xpose.msra.mxu0 0
        %787 = vmatprep.subr.bf16.mxu0 0
        %788 = vmatpush1.bf16.xpose.msra.mxu0 0
        %789 = vmatprep.subr.bf16.mxu0 0
        %790 = vmatpush1.bf16.xpose.msra.mxu0 %v773
        %791 = vmatprep.subr.bf16.mxu0 0
        %792 = vmatpush2.bf16.xpose.msra.mxu0 0
        %793 = vmatprep.subr.bf16.mxu0 0
        %794 = vmatpush2.bf16.xpose.msra.mxu0 0
        %795 = vmatprep.subr.bf16.mxu0 0
        %796 = vmatpush2.bf16.xpose.msra.mxu0 0
        %797 = vmatprep.subr.bf16.mxu0 0
        %798 = vmatpush2.bf16.xpose.msra.mxu0 0
        %799 = vmatprep.subr.bf16.mxu0 0
        %800 = vmatpush2.bf16.xpose.msra.mxu0 0
        %801 = vmatprep.subr.bf16.mxu0 0
        %802 = vmatpush2.bf16.xpose.msra.mxu0 0
        %803 = vmatprep.subr.bf16.mxu0 0
        %804 = vmatpush2.bf16.xpose.msra.mxu0 0
        %805 = vmatprep.subr.bf16.mxu0 0
        %806 = vmatpush2.bf16.xpose.msra.mxu0 0
        %807 = vmatprep.mubr.bf16.mxu0 0
        %808 = vmatmul.mubr.bf16.gmra.mxu0 %v770
        %v809 = vpop.f32.mrf.mxu0
        %v810 = vadd.f32 0.0, %v809
        %v811 = vpop.f32.mrf.mxu0
        %v812 = vpop.f32.mrf.mxu0
        %v813 = vpop.f32.mrf.mxu0
        %814 = vdwg.mxu0
        %v815 = vsel %vm290, %v810, -inf
        %816 = vmax.xlane.f32.xlu0 %v815
        %v817 = vpop.xlane.xlu0 %816
        %v818 = vsub.f32 %v810, %v817
        %v819 = vmul.f32 %v818, 1.442695
        %v820 = vpow.pop %v819
        %v821 = vsel %vm290, %v820, 0.0
        %822 = vadd.xlane.f32.xlu0 %v821
        %v823 = vpop.xlane.xlu0 %822
        %v824 = vrcp.pop %v823
        %v825 = vmul.f32 1.0, %v824
        %v826 = vmul.f32 %v820, %v825
        %v827 = vpack.c.bf16 %v826, %v826
        %s828 = scalar_lea.vmem %s266, 12 [#allocation2]
        %829 = vst.msk [vmem:[%s828] sm:$0xf] %vm350, %v827
        %v831 = vsel %vm290, %v827, 0
        %v833 = vsel %vm355, %v768, 0
        %835 = vmatprep.subr.bf16.mxu0 0
        %836 = vmatpush1.bf16.msra.mxu0 0
        %837 = vmatprep.subr.bf16.mxu0 0
        %838 = vmatpush1.bf16.msra.mxu0 0
        %839 = vmatprep.subr.bf16.mxu0 0
        %840 = vmatpush1.bf16.msra.mxu0 0
        %841 = vmatprep.subr.bf16.mxu0 0
        %842 = vmatpush1.bf16.msra.mxu0 0
        %843 = vmatprep.subr.bf16.mxu0 0
        %844 = vmatpush1.bf16.msra.mxu0 0
        %845 = vmatprep.subr.bf16.mxu0 0
        %846 = vmatpush1.bf16.msra.mxu0 0
        %847 = vmatprep.subr.bf16.mxu0 0
        %848 = vmatpush1.bf16.msra.mxu0 0
        %849 = vmatprep.subr.bf16.mxu0 0
        %850 = vmatpush1.bf16.msra.mxu0 %v833
        %851 = vmatprep.subr.bf16.mxu0 0
        %852 = vmatpush2.bf16.msra.mxu0 0
        %853 = vmatprep.subr.bf16.mxu0 0
        %854 = vmatpush2.bf16.msra.mxu0 0
        %855 = vmatprep.subr.bf16.mxu0 0
        %856 = vmatpush2.bf16.msra.mxu0 0
        %857 = vmatprep.subr.bf16.mxu0 0
        %858 = vmatpush2.bf16.msra.mxu0 0
        %859 = vmatprep.subr.bf16.mxu0 0
        %860 = vmatpush2.bf16.msra.mxu0 0
        %861 = vmatprep.subr.bf16.mxu0 0
        %862 = vmatpush2.bf16.msra.mxu0 0
        %863 = vmatprep.subr.bf16.mxu0 0
        %864 = vmatpush2.bf16.msra.mxu0 0
        %865 = vmatprep.subr.bf16.mxu0 0
        %866 = vmatpush2.bf16.msra.mxu0 0
        %867 = vmatprep.mubr.bf16.mxu0 0
        %868 = vmatmul.mubr.bf16.gmra.mxu0 %v831
        %v869 = vpop.f32.mrf.mxu0
        %v870 = vadd.f32 0.0, %v869
        %v871 = vpop.f32.mrf.mxu0
        %v872 = vpop.f32.mrf.mxu0
        %v873 = vpop.f32.mrf.mxu0
        %874 = vdwg.mxu0
        %v875 = vpack.c.bf16 %v870, %v870
        %s876 = scalar_lea.vmem %s2, 12
        %v877 = vld [vmem:[%s876] sm:$0xf]
        %v879 = vsel %vm290, %v875, 0
        %v882 = vsel %vm355, %v877, 0
        %884 = vmatprep.subr.bf16.mxu0 0
        %885 = vmatpush1.bf16.msra.mxu0 0
        %886 = vmatprep.subr.bf16.mxu0 0
        %887 = vmatpush1.bf16.msra.mxu0 0
        %888 = vmatprep.subr.bf16.mxu0 0
        %889 = vmatpush1.bf16.msra.mxu0 0
        %890 = vmatprep.subr.bf16.mxu0 0
        %891 = vmatpush1.bf16.msra.mxu0 0
        %892 = vmatprep.subr.bf16.mxu0 0
        %893 = vmatpush1.bf16.msra.mxu0 0
        %894 = vmatprep.subr.bf16.mxu0 0
        %895 = vmatpush1.bf16.msra.mxu0 0
        %896 = vmatprep.subr.bf16.mxu0 0
        %897 = vmatpush1.bf16.msra.mxu0 0
        %898 = vmatprep.subr.bf16.mxu0 0
        %899 = vmatpush1.bf16.msra.mxu0 %v882
        %900 = vmatprep.subr.bf16.mxu0 0
        %901 = vmatpush2.bf16.msra.mxu0 0
        %902 = vmatprep.subr.bf16.mxu0 0
        %903 = vmatpush2.bf16.msra.mxu0 0
        %904 = vmatprep.subr.bf16.mxu0 0
        %905 = vmatpush2.bf16.msra.mxu0 0
        %906 = vmatprep.subr.bf16.mxu0 0
        %907 = vmatpush2.bf16.msra.mxu0 0
        %908 = vmatprep.subr.bf16.mxu0 0
        %909 = vmatpush2.bf16.msra.mxu0 0
        %910 = vmatprep.subr.bf16.mxu0 0
        %911 = vmatpush2.bf16.msra.mxu0 0
        %912 = vmatprep.subr.bf16.mxu0 0
        %913 = vmatpush2.bf16.msra.mxu0 0
        %914 = vmatprep.subr.bf16.mxu0 0
        %915 = vmatpush2.bf16.msra.mxu0 0
        %916 = vmatprep.mubr.bf16.mxu0 0
        %917 = vmatmul.mubr.bf16.gmra.mxu0 %v879
        %v918 = vpop.f32.mrf.mxu0
        %v919 = vadd.f32 0.0, %v918
        %v920 = vpop.f32.mrf.mxu0
        %v921 = vpop.f32.mrf.mxu0
        %v922 = vpop.f32.mrf.mxu0
        %923 = vdwg.mxu0
        %v924 = vadd.f32 %v764, %v919
        %v925 = vld [vmem:[%s3] sm:$0x1]
        %v926 = vunpack.c.l.bf16 %v925
        %v927 = vlaneseq
        %v928 = vshrl.u32 %v927, 7
        %v929 = vsub.s32 0, %v928
        %v930 = vrot.slane %v926, %v929
        %v931 = vadd.f32 %v924, %v930
        %vm932 = vcmask 261120
        %933 = vst.msk [vmem:[%s286] sm:$0xff] %vm932, %v931
        %p934 = scmp.lt.s32.totalorder %s24, 1
        %s935 = scalar_select %p934, %s24, 1
        %p936 = scmp.lt.s32.totalorder %s25, 0
        %s937 = scalar_select %p936, %s25, 0
        %s938 = sadd.s32 %s937, %s935
        %s939 = smul.addr %s938, 8
        %s940 = scalar_lea.vmem %s4, %s939
        %s941 = sand.u32 %s166, 1
        %s942 = scalar_lea.sflag [#allocation3], %s941
        %s943 = sand.u32 %s166, 1
        %s944 = smul.addr %s943, 16
        %s945 = scalar_lea.vmem [#allocation2], %s944
        // Predicated region
        $region37: #{source_attention_forward.5} parent=35 // pred_check
          %p946 = pneg %p148
        $region38: #{source_attention_forward.5} parent=35 // pred_check_branch
          %948 = sbr.rel (%p946) target = $region40
        $region39: #{source_attention_forward.5} parent=35 // pred_region
          _
        $region40: #{source_attention_forward.5} parent=35 // pred_fallthru
          _
        // Predicated region
        $region41: #{source_attention_forward.5} parent=35 // pred_check
          %p949 = pneg %p176
        $region42: #{source_attention_forward.5} parent=35 // pred_check_branch
          %951 = sbr.rel (%p949) target = $region44
        $region43: #{source_attention_forward.5} parent=35 // pred_region
          %s953 = ssub.s32 256, 256
          %954 = vsyncadd %s942, %s953
          %s955 = smul.addr %s24, 4
          %s956 = sadd.s32 %s25, %s955
          %s957 = smul.addr %s956, 64
          %s958 = scalar_lea.hbm %s5, %s957
          %s959 = sshll.u32 %s945, 4
          %s960 = int_to_ptr.vmem [resolvable:$true] %s959
          %965 = dma.vmem_to_hbm [thread:$0]  %s960, 256, %s958, %s942, 64, 64, 4
        $region44: #{source_attention_forward.5} parent=35 // pred_fallthru
          _
      $region36: #{source_attention_forward.5} parent=5 // pred_fallthru
        _
      %p966 = scmp.le.s32.totalorder 2, %s15
      // Predicated region
      $region45: #{source_attention_forward.5} parent=5 // pred_check
        %p967 = pneg %p966
      $region46: #{source_attention_forward.5} parent=5 // pred_check_branch
        %969 = sbr.rel (%p967) target = $region48
      $region47: #{source_attention_forward.5} parent=5 // pred_region
        %s970 = ssub.s32 %s15, 2
        // Predicated region
        $region49: #{source_attention_forward.5} parent=47 // pred_check
          %p971 = pneg %p154
        $region50: #{source_attention_forward.5} parent=47 // pred_check_branch
          %973 = sbr.rel (%p971) target = $region52
        $region51: #{source_attention_forward.5} parent=47 // pred_region
          %p974 = scmp.lt.s32.totalorder %s26, 1
          %s975 = scalar_select %p974, %s26, 1
          %p976 = scmp.lt.s32.totalorder %s27, 0
          %s977 = scalar_select %p976, %s27, 0
          %s978 = sadd.s32 %s977, %s975
          %s979 = smul.addr %s978, 8
          %s980 = scalar_lea.vmem %s4, %s979
        $region52: #{source_attention_forward.5} parent=47 // pred_fallthru
          _
        // Predicated region
        $region53: #{source_attention_forward.5} parent=47 // pred_check
          %p981 = pneg %p182
        $region54: #{source_attention_forward.5} parent=47 // pred_check_branch
          %983 = sbr.rel (%p981) target = $region56
        $region55: #{source_attention_forward.5} parent=47 // pred_region
          %s984 = sand.u32 %s167, 1
          %s985 = scalar_lea.sflag [#allocation3], %s984
          %s986 = sand.u32 %s167, 1
          %s987 = smul.addr %s986, 16
          %s988 = scalar_lea.vmem [#allocation2], %s987
          %989 = dma.done %s985, 256
        $region56: #{source_attention_forward.5} parent=47 // pred_fallthru
          _
      $region48: #{source_attention_forward.5} parent=5 // pred_fallthru
        _
    $region6: #{source_attention_forward.5} parent=1 // loop_footer
      %s19 = sadd.s32 1, %s15
    $region7: #{source_attention_forward.5} parent=1 // loop_footer_branch
      %14 = sbr.rel target = $region3
    $region8: #{source_attention_forward.5} parent=1 // loop_exit
      _
    %990 = vsyncpa [#allocation3], 1
    %s991 = scalar_lea.sflag [#allocation3], 1
    %992 = vsyncpa %s991, 1

</llo_original>
